<compile_context>
chip_gen: v5e
topology: v5e:2x2
jax: 0.10.0
libtpu: 0.0.40
codegen_flags: <defaults>
</compile_context>

<pallas_src>
import functools

import jax
import jax.numpy as jnp
import numpy as np
from jax import lax
from jax.experimental import pallas as pl
from jax.experimental.pallas import tpu as pltpu

NB_STATES = 75
HIDDEN1 = 400
HIDDEN2 = 300
NB_ACTIONS = 4

# Lane-aligned padded hidden dims used inside the kernel (weights zero-padded
# offline, so the extra columns/rows are exact zeros and do not change math).
HIDDEN1_P = 512
HIDDEN2_P = 384


def _mlp_body(x_norm, w1_ref, b1_ref, w2_ref, b2_ref, w3_ref, b3_ref):
    """fc1+ReLU, fc2+ReLU, fc3+Sigmoid on a normalized (M, 75) f32 block."""
    h1 = jnp.dot(x_norm.astype(jnp.bfloat16), w1_ref[...],
                 preferred_element_type=jnp.float32) + b1_ref[...]
    h1 = jnp.maximum(h1, 0.0)

    h2 = jnp.dot(h1.astype(jnp.bfloat16), w2_ref[...],
                 preferred_element_type=jnp.float32) + b2_ref[...]
    h2 = jnp.maximum(h2, 0.0)

    h3 = jnp.dot(h2.astype(jnp.bfloat16), w3_ref[...],
                 preferred_element_type=jnp.float32) + b3_ref[...]

    # Numerically stable sigmoid on the EUP path (exp + approx reciprocal).
    e = jnp.exp(-jnp.abs(h3))                     # in (0, 1], never inf
    r = pl.reciprocal(1.0 + e, approx=True)
    return jnp.where(h3 >= 0.0, r, e * r)


def _actor_global_kernel(x_ref, w1_ref, b1_ref, w2_ref, b2_ref, w3_ref, b3_ref,
                         o_ref, *, n_valid):
    """Whole-tensor (global) normalization — exact torch semantics."""
    x = x_ref[...]                                # (B, 75) f32
    n = float(n_valid)
    mean = jnp.sum(x) * (1.0 / n)
    diff = x - mean
    var = jnp.sum(diff * diff) * (1.0 / (n - 1.0))   # unbiased, like torch .std()
    # TODO(synk): torch asserts x.std() > 0.001; there is no clean in-kernel
    # runtime assert, so we only clamp var to avoid inf/NaN on degenerate input.
    var = jnp.maximum(var, 1e-12)
    x_norm = diff * lax.rsqrt(var)
    o_ref[...] = _mlp_body(x_norm, w1_ref, b1_ref, w2_ref, b2_ref,
                           w3_ref, b3_ref).astype(o_ref.dtype)


def _actor_perobs_kernel(x_ref, w1_ref, b1_ref, w2_ref, b2_ref, w3_ref, b3_ref,
                         o_ref):
    """Per-row normalization: each row is an independent single observation."""
    x = x_ref[...]                                # (obs_tile, 75) f32
    n = float(NB_STATES)
    mean = jnp.sum(x, axis=-1, keepdims=True) * (1.0 / n)
    diff = x - mean
    var = jnp.sum(diff * diff, axis=-1, keepdims=True) * (1.0 / (n - 1.0))
    var = jnp.maximum(var, 1e-12)
    x_norm = diff * lax.rsqrt(var)
    o_ref[...] = _mlp_body(x_norm, w1_ref, b1_ref, w2_ref, b2_ref,
                           w3_ref, b3_ref).astype(o_ref.dtype)


def _cost_estimate(n_rows, prepped_params):
    weight_bytes = sum(int(np.prod(a.shape)) * a.dtype.itemsize
                       for a in prepped_params)
    flops = 2 * n_rows * (NB_STATES * HIDDEN1_P
                          + HIDDEN1_P * HIDDEN2_P
                          + HIDDEN2_P * NB_ACTIONS)
    bytes_accessed = weight_bytes + n_rows * NB_STATES * 4 + n_rows * NB_ACTIONS * 4
    transcendentals = n_rows * (NB_ACTIONS + 2)   # exp per action + rsqrt + rcp
    return pl.CostEstimate(flops=flops, transcendentals=transcendentals,
                           bytes_accessed=bytes_accessed)


@jax.jit
def actor_forward(x_input, prepped_params):
    """Exact torch Actor.forward semantics (global mean/std over the tensor)."""
    # Glue: the "flatten single observation" branch (static shape decision).
    if x_input.ndim >= 2 and x_input.shape[0] * x_input.shape[1] == NB_STATES:
        x = jnp.reshape(x_input, (1, NB_STATES))
    else:
        x = x_input
    x = x.astype(jnp.float32)
    batch = x.shape[0]

    w1, b1, w2, b2, w3, b3 = prepped_params
    vmem = pl.BlockSpec(memory_space=pltpu.MemorySpace.VMEM)
    kernel = functools.partial(_actor_global_kernel, n_valid=batch * NB_STATES)

    # Grid-less: the whole working set (< 1 MiB at small batch) is one VMEM
    # block.  For very large batches with shared statistics, tile with a grid
    # and a stats pre-pass instead (VMEM headroom: 64 MiB on v7x).
    return pl.pallas_call(
        kernel,
        out_shape=jax.ShapeDtypeStruct((batch, NB_ACTIONS), jnp.float32),
        in_specs=[vmem] * 7,
        out_specs=vmem,
        cost_estimate=_cost_estimate(batch, prepped_params),
    )(x, w1, b1, w2, b2, w3, b3)


@functools.partial(jax.jit, static_argnames=("obs_tile",))
def actor_forward_many(obs, prepped_params, obs_tile=8):
    """N independent observations [N, 75]; per-row normalization.

    Equivalent to N separate torch Actor.forward calls on single observations,
    but executed as ONE pallas_call: weights stay VMEM-resident across the
    observation grid (constant index_maps), x/out tiles are pipelined.
    """
    obs = obs.astype(jnp.float32)
    n_obs = obs.shape[0]
    rem = n_obs % obs_tile
    if rem:  # static-shape decision; rare path
        obs = jnp.pad(obs, ((0, obs_tile - rem), (0, 0)))
    n_pad = obs.shape[0]

    w1, b1, w2, b2, w3, b3 = prepped_params

    out = pl.pallas_call(
        _actor_perobs_kernel,
        out_shape=jax.ShapeDtypeStruct((n_pad, NB_ACTIONS), jnp.float32),
        grid=(n_pad // obs_tile,),
        in_specs=[
            pl.BlockSpec((obs_tile, NB_STATES), lambda i: (i, 0)),     # x tile
            pl.BlockSpec((NB_STATES, HIDDEN1_P), lambda i: (0, 0)),    # w1 (resident)
            pl.BlockSpec((1, HIDDEN1_P), lambda i: (0, 0)),            # b1
            pl.BlockSpec((HIDDEN1_P, HIDDEN2_P), lambda i: (0, 0)),    # w2
            pl.BlockSpec((1, HIDDEN2_P), lambda i: (0, 0)),            # b2
            pl.BlockSpec((HIDDEN2_P, NB_ACTIONS), lambda i: (0, 0)),   # w3
            pl.BlockSpec((1, NB_ACTIONS), lambda i: (0, 0)),           # b3
        ],
        out_specs=pl.BlockSpec((obs_tile, NB_ACTIONS), lambda i: (i, 0)),
        compiler_params=pltpu.CompilerParams(
            dimension_semantics=("parallel",)),    # v7x: split obs across 2 TCs
        cost_estimate=_cost_estimate(n_pad, prepped_params),
    )(obs, w1, b1, w2, b2, w3, b3)

    return out[:n_obs] if rem else out


def init_params(key):
    """Deterministic synthetic f32 parameters (fan-in uniform, like nn.Linear).

    Weights are [in_features, out_features] (transposed w.r.t. torch's
    nn.Linear weight), biases are [1, out_features].
    """
    ks = jax.random.split(key, 6)

    def lin(kw, kb, fan_in, fan_out):
        bound = 1.0 / np.sqrt(fan_in)
        w = jax.random.uniform(kw, (fan_in, fan_out), jnp.float32, -bound, bound)
        b = jax.random.uniform(kb, (1, fan_out), jnp.float32, -bound, bound)
        return w, b

    w1, b1 = lin(ks[0], ks[1], NB_STATES, HIDDEN1)
    w2, b2 = lin(ks[2], ks[3], HIDDEN1, HIDDEN2)
    w3, b3 = lin(ks[4], ks[5], HIDDEN2, NB_ACTIONS)
    return (w1, b1, w2, b2, w3, b3)


def prepare_params(params):
    """One-time offline prep: zero-pad hidden dims to lane multiples, cast
    weights to bf16.  Input width stays 75, output width stays 4 (no padded
    w3 columns -> less weight DMA, no output slice)."""
    w1, b1, w2, b2, w3, b3 = params

    def pad2(a, rows, cols):
        return jnp.pad(a, ((0, rows - a.shape[0]), (0, cols - a.shape[1])))

    w1p = pad2(w1, NB_STATES, HIDDEN1_P).astype(jnp.bfloat16)
    w2p = pad2(w2, HIDDEN1_P, HIDDEN2_P).astype(jnp.bfloat16)
    w3p = pad2(w3, HIDDEN2_P, NB_ACTIONS).astype(jnp.bfloat16)
    b1p = pad2(b1, 1, HIDDEN1_P).astype(jnp.float32)
    b2p = pad2(b2, 1, HIDDEN2_P).astype(jnp.float32)
    b3p = b3.astype(jnp.float32)
    return (w1p, b1p, w2p, b2p, w3p, b3p)


def _reference_forward(x_input, params):
    """Pure-JAX f32 reference (original, unpadded weights), torch semantics."""
    if x_input.ndim >= 2 and x_input.shape[0] * x_input.shape[1] == NB_STATES:
        x = jnp.reshape(x_input, (1, NB_STATES))
    else:
        x = x_input
    x = x.astype(jnp.float32)
    n = x.size
    mean = jnp.mean(x)
    std = jnp.sqrt(jnp.sum((x - mean) ** 2) / (n - 1))  # unbiased, like torch
    x = (x - mean) / std
    w1, b1, w2, b2, w3, b3 = params
    h = jnp.maximum(x @ w1 + b1, 0.0)
    h = jnp.maximum(h @ w2 + b2, 0.0)
    return jax.nn.sigmoid(h @ w3 + b3)


def _reference_forward_many(obs, params):
    """Pure-JAX reference: each row treated as an independent observation."""
    obs = obs.astype(jnp.float32)
    n = obs.shape[-1]
    mean = jnp.mean(obs, axis=-1, keepdims=True)
    std = jnp.sqrt(jnp.sum((obs - mean) ** 2, axis=-1, keepdims=True) / (n - 1))
    x = (obs - mean) / std
    w1, b1, w2, b2, w3, b3 = params
    h = jnp.maximum(x @ w1 + b1, 0.0)
    h = jnp.maximum(h @ w2 + b2, 0.0)
    return jax.nn.sigmoid(h @ w3 + b3)


if __name__ == "__main__":
    key = jax.random.PRNGKey(0)
    k_params, k_many, k_batch = jax.random.split(key, 3)

    params = init_params(k_params)            # true f32 module params
    prepped = prepare_params(params)          # bf16, lane-padded kernel params

    # 1) High-throughput path: 16 independent observations, grid of 2 tiles,
    #    weights DMA'd once and resident across the grid.
    obs = jax.random.normal(k_many, (16, NB_STATES), dtype=jnp.float32)
    out_many = jax.block_until_ready(actor_forward_many(obs, prepped))
    ref_many = _reference_forward_many(obs, params)
    np.testing.assert_allclose(np.asarray(out_many), np.asarray(ref_many),
                               rtol=1e-2, atol=1e-2)

    # 2) Exact torch-semantics batched path (shared global mean/std): [2, 75].
    x = jax.random.normal(k_batch, (2, NB_STATES), dtype=jnp.float32)
    out = jax.block_until_ready(actor_forward(x, prepped))
    ref = _reference_forward(x, params)
    np.testing.assert_allclose(np.asarray(out), np.asarray(ref),
                               rtol=1e-2, atol=1e-2)

    # 3) Single-observation "flatten" branch: [5, 15] -> 75 elements -> [1, 75].
    x1 = jax.random.normal(jax.random.PRNGKey(1), (5, 15), dtype=jnp.float32)
    out1 = jax.block_until_ready(actor_forward(x1, prepped))
    ref1 = _reference_forward(x1, params)
    np.testing.assert_allclose(np.asarray(out1), np.asarray(ref1),
                               rtol=1e-2, atol=1e-2)

    print("KERNEL_OK")
</pallas_src>

<mosaic_0001>
module attributes {stable_mosaic.version = 11 : i64} {
  func.func @_actor_perobs_kernel(%arg0: i32, %arg1: memref<8x75xf32, #tpu.memory_space<vmem>>, %arg2: memref<75x512xbf16, #tpu.memory_space<vmem>>, %arg3: memref<1x512xf32, #tpu.memory_space<vmem>>, %arg4: memref<512x384xbf16, #tpu.memory_space<vmem>>, %arg5: memref<1x384xf32, #tpu.memory_space<vmem>>, %arg6: memref<384x4xbf16, #tpu.memory_space<vmem>>, %arg7: memref<1x4xf32, #tpu.memory_space<vmem>>, %arg8: memref<8x4xf32, #tpu.memory_space<vmem>>) attributes {dimension_semantics = [#tpu.dimension_semantics<parallel>], iteration_bounds = array<i64: 2>, scalar_prefetch = 0 : i64, scratch_operands = 0 : i64, tpu.core_type = #tpu.core_type<tc>, window_params = [{transform_indices = @transform_0, window_bounds = array<i64: 8, 75>}, {pipeline_mode = #tpu.pipeline_mode<synchronous>, transform_indices = @transform_1, window_bounds = array<i64: 75, 512>}, {pipeline_mode = #tpu.pipeline_mode<synchronous>, transform_indices = @transform_2, window_bounds = array<i64: 1, 512>}, {pipeline_mode = #tpu.pipeline_mode<synchronous>, transform_indices = @transform_3, window_bounds = array<i64: 512, 384>}, {pipeline_mode = #tpu.pipeline_mode<synchronous>, transform_indices = @transform_4, window_bounds = array<i64: 1, 384>}, {pipeline_mode = #tpu.pipeline_mode<synchronous>, transform_indices = @transform_5, window_bounds = array<i64: 384, 4>}, {pipeline_mode = #tpu.pipeline_mode<synchronous>, transform_indices = @transform_6, window_bounds = array<i64: 1, 4>}, {transform_indices = @transform_7, window_bounds = array<i64: 8, 4>}]} {
    %c0 = arith.constant 0 : index
    %c0_0 = arith.constant 0 : index
    %0 = vector.load %arg1[%c0, %c0_0] : memref<8x75xf32, #tpu.memory_space<vmem>>, vector<8x75xf32>
    %cst = arith.constant dense<0.000000e+00> : vector<8xf32>
    %1 = vector.multi_reduction <add>, %0, %cst [1] : vector<8x75xf32> to vector<8xf32>
    %2 = vector.shape_cast %1 : vector<8xf32> to vector<8x1xf32>
    %cst_1 = arith.constant 0.0133333337 : f32
    %3 = vector.broadcast %cst_1 : f32 to vector<8x1xf32>
    %4 = arith.mulf %2, %3 : vector<8x1xf32>
    %5 = vector.broadcast %4 : vector<8x1xf32> to vector<8x75xf32>
    %6 = arith.subf %0, %5 : vector<8x75xf32>
    %7 = arith.mulf %6, %6 : vector<8x75xf32>
    %cst_2 = arith.constant dense<0.000000e+00> : vector<8xf32>
    %8 = vector.multi_reduction <add>, %7, %cst_2 [1] : vector<8x75xf32> to vector<8xf32>
    %9 = vector.shape_cast %8 : vector<8xf32> to vector<8x1xf32>
    %cst_3 = arith.constant 0.0135135138 : f32
    %10 = vector.broadcast %cst_3 : f32 to vector<8x1xf32>
    %11 = arith.mulf %9, %10 : vector<8x1xf32>
    %cst_4 = arith.constant 9.99999996E-13 : f32
    %12 = vector.broadcast %cst_4 : f32 to vector<8x1xf32>
    %13 = arith.maximumf %11, %12 : vector<8x1xf32>
    %14 = math.rsqrt %13 : vector<8x1xf32>
    %15 = vector.broadcast %14 : vector<8x1xf32> to vector<8x75xf32>
    %16 = arith.mulf %6, %15 : vector<8x75xf32>
    %17 = arith.truncf %16 : vector<8x75xf32> to vector<8x75xbf16>
    %c0_5 = arith.constant 0 : index
    %c0_6 = arith.constant 0 : index
    %18 = vector.load %arg2[%c0_5, %c0_6] : memref<75x512xbf16, #tpu.memory_space<vmem>>, vector<75x512xbf16>
    %cst_7 = arith.constant dense<0.000000e+00> : vector<8x512xf32>
    %19 = tpu.matmul %17, %18, %cst_7 {dimension_numbers = #tpu.dot_dimension_numbers<[1], [0], [0], [1], [0, 0, 1, 1], [], []>} : vector<8x75xbf16>, vector<75x512xbf16>, vector<8x512xf32> -> vector<8x512xf32>
    %c0_8 = arith.constant 0 : index
    %c0_9 = arith.constant 0 : index
    %20 = vector.load %arg3[%c0_8, %c0_9] : memref<1x512xf32, #tpu.memory_space<vmem>>, vector<1x512xf32>
    %21 = vector.broadcast %20 : vector<1x512xf32> to vector<8x512xf32>
    %22 = arith.addf %19, %21 : vector<8x512xf32>
    %cst_10 = arith.constant 0.000000e+00 : f32
    %23 = vector.broadcast %cst_10 : f32 to vector<8x512xf32>
    %24 = arith.maximumf %22, %23 : vector<8x512xf32>
    %25 = arith.truncf %24 : vector<8x512xf32> to vector<8x512xbf16>
    %c0_11 = arith.constant 0 : index
    %c0_12 = arith.constant 0 : index
    %26 = vector.load %arg4[%c0_11, %c0_12] : memref<512x384xbf16, #tpu.memory_space<vmem>>, vector<512x384xbf16>
    %cst_13 = arith.constant dense<0.000000e+00> : vector<8x384xf32>
    %27 = tpu.matmul %25, %26, %cst_13 {dimension_numbers = #tpu.dot_dimension_numbers<[1], [0], [0], [1], [0, 0, 1, 1], [], []>} : vector<8x512xbf16>, vector<512x384xbf16>, vector<8x384xf32> -> vector<8x384xf32>
    %c0_14 = arith.constant 0 : index
    %c0_15 = arith.constant 0 : index
    %28 = vector.load %arg5[%c0_14, %c0_15] : memref<1x384xf32, #tpu.memory_space<vmem>>, vector<1x384xf32>
    %29 = vector.broadcast %28 : vector<1x384xf32> to vector<8x384xf32>
    %30 = arith.addf %27, %29 : vector<8x384xf32>
    %cst_16 = arith.constant 0.000000e+00 : f32
    %31 = vector.broadcast %cst_16 : f32 to vector<8x384xf32>
    %32 = arith.maximumf %30, %31 : vector<8x384xf32>
    %33 = arith.truncf %32 : vector<8x384xf32> to vector<8x384xbf16>
    %c0_17 = arith.constant 0 : index
    %c0_18 = arith.constant 0 : index
    %34 = vector.load %arg6[%c0_17, %c0_18] : memref<384x4xbf16, #tpu.memory_space<vmem>>, vector<384x4xbf16>
    %cst_19 = arith.constant dense<0.000000e+00> : vector<8x4xf32>
    %35 = tpu.matmul %33, %34, %cst_19 {dimension_numbers = #tpu.dot_dimension_numbers<[1], [0], [0], [1], [0, 0, 1, 1], [], []>} : vector<8x384xbf16>, vector<384x4xbf16>, vector<8x4xf32> -> vector<8x4xf32>
    %c0_20 = arith.constant 0 : index
    %c0_21 = arith.constant 0 : index
    %36 = vector.load %arg7[%c0_20, %c0_21] : memref<1x4xf32, #tpu.memory_space<vmem>>, vector<1x4xf32>
    %37 = vector.broadcast %36 : vector<1x4xf32> to vector<8x4xf32>
    %38 = arith.addf %35, %37 : vector<8x4xf32>
    %39 = math.absf %38 : vector<8x4xf32>
    %cst_22 = arith.constant 0.000000e+00 : f32
    %40 = vector.broadcast %cst_22 : f32 to vector<8x4xf32>
    %41 = arith.subf %40, %39 : vector<8x4xf32>
    %42 = math.exp %41 : vector<8x4xf32>
    %cst_23 = arith.constant 1.000000e+00 : f32
    %43 = vector.broadcast %cst_23 : f32 to vector<8x4xf32>
    %44 = arith.addf %43, %42 : vector<8x4xf32>
    %45 = tpu.reciprocal %44 {approx = true} : vector<8x4xf32> -> vector<8x4xf32>
    %cst_24 = arith.constant 0.000000e+00 : f32
    %46 = vector.broadcast %cst_24 : f32 to vector<8x4xf32>
    %47 = arith.cmpf oge, %38, %46 : vector<8x4xf32>
    %48 = arith.mulf %42, %45 : vector<8x4xf32>
    %49 = arith.select %47, %45, %48 : vector<8x4xi1>, vector<8x4xf32>
    %c0_25 = arith.constant 0 : index
    %c0_26 = arith.constant 0 : index
    %50 = vector.load %arg8[%c0_25, %c0_26] : memref<8x4xf32, #tpu.memory_space<vmem>>, vector<8x4xf32>
    tpu.vector_store %arg8[%c0_25, %c0_26], %49 {strides = array<i32>} : memref<8x4xf32, #tpu.memory_space<vmem>>, vector<8x4xf32>,
    return
  }
  func.func @transform_0(%arg0: i32) -> (i32, i32) {
    %c0_i32 = arith.constant 0 : i32
    %c0_i32_0 = arith.constant 0 : i32
    return %arg0, %c0_i32 : i32, i32
  }
  func.func @transform_1(%arg0: i32) -> (i32, i32) {
    %c0_i32 = arith.constant 0 : i32
    %c0_i32_0 = arith.constant 0 : i32
    %c0_i32_1 = arith.constant 0 : i32
    return %c0_i32, %c0_i32_0 : i32, i32
  }
  func.func @transform_2(%arg0: i32) -> (i32, i32) {
    %c0_i32 = arith.constant 0 : i32
    %c0_i32_0 = arith.constant 0 : i32
    %c0_i32_1 = arith.constant 0 : i32
    return %c0_i32, %c0_i32_0 : i32, i32
  }
  func.func @transform_3(%arg0: i32) -> (i32, i32) {
    %c0_i32 = arith.constant 0 : i32
    %c0_i32_0 = arith.constant 0 : i32
    %c0_i32_1 = arith.constant 0 : i32
    return %c0_i32, %c0_i32_0 : i32, i32
  }
  func.func @transform_4(%arg0: i32) -> (i32, i32) {
    %c0_i32 = arith.constant 0 : i32
    %c0_i32_0 = arith.constant 0 : i32
    %c0_i32_1 = arith.constant 0 : i32
    return %c0_i32, %c0_i32_0 : i32, i32
  }
  func.func @transform_5(%arg0: i32) -> (i32, i32) {
    %c0_i32 = arith.constant 0 : i32
    %c0_i32_0 = arith.constant 0 : i32
    %c0_i32_1 = arith.constant 0 : i32
    return %c0_i32, %c0_i32_0 : i32, i32
  }
  func.func @transform_6(%arg0: i32) -> (i32, i32) {
    %c0_i32 = arith.constant 0 : i32
    %c0_i32_0 = arith.constant 0 : i32
    %c0_i32_1 = arith.constant 0 : i32
    return %c0_i32, %c0_i32_0 : i32, i32
  }
  func.func @transform_7(%arg0: i32) -> (i32, i32) {
    %c0_i32 = arith.constant 0 : i32
    %c0_i32_0 = arith.constant 0 : i32
    return %arg0, %c0_i32 : i32, i32
  }
}

</mosaic_0001>

<llo_original>
// kernel: actor_forward_many.1
$region0: #{actor_forward_many.1}
  #allocation0 [shape = 'u32[]', space=smem, size = 0x4, offset = 0x4, fixed_abs, tag = 'smem constant byte address 0x4 - core index']
  #allocation1 [shape = 'u32[72,128]{1,0:T(1,128)}', space=vmem, size = 0x9000, scoped, tag = 'internal scratch']
  %s0 = inlined_call_operand.vmem [shape: f32[16,75], index: 0, kind: input, shape index: {}]
  %s1 = inlined_call_operand.vmem [shape: bf16[75,512], index: 1, kind: input, shape index: {}]
  %s2 = inlined_call_operand.vmem [shape: f32[1,512], index: 2, kind: input, shape index: {}]
  %s3 = inlined_call_operand.hbm [shape: bf16[512,384], index: 3, kind: input, shape index: {}]
  %s4 = inlined_call_operand.vmem [shape: f32[1,384], index: 4, kind: input, shape index: {}]
  %s5 = inlined_call_operand.vmem [shape: bf16[384,4], index: 5, kind: input, shape index: {}]
  %s6 = inlined_call_operand.vmem [shape: f32[1,4], index: 6, kind: input, shape index: {}]
  %s7 = inlined_call_operand.vmem [shape: f32[16,4], index: 7, kind: output, shape index: {}]
  %s8 = sld [smem:[#allocation0]]
  $region65: #{actor_forward_many.1} parent=0
    _
  %s10 = ssub.s32 1, %s8
  %s11 = scalar_select 0, %s10, %s8
  $region1: #{actor_forward_many.1} parent=0
    #allocation2 [shape = 'u8[393216]{0}', space=vmem, size = 0x60000, scoped, tag = 'input window, operand 3, single buffered']
    #allocation3 [shape = 's32[2]{0}', space=sflag, size = 0x8, scoped, tag = 'scoped memory for actor_forward_many.1']
    %12 = vsyncpa [#allocation3], 0
    loop: start=0, step=1, limit=4
    $region2: #{actor_forward_many.1} parent=1 // loop_pre_header
      _
    $region3: #{actor_forward_many.1} parent=1 // loop_header
      %s14 = sphi 0, %s18
      %p15 = scmp.ge.s32.totalorder %s14, 4
      %s24 = sphi 0, %s26
      %s27 = sphi 0, %s24
      %s28 = sphi 0, %s27
      %s44 = sphi 0, %s28
      %s48 = sphi 0, %s48
      %s50 = sphi 0, %s48
      %s51 = sphi 0, %s50
      %s65 = sphi 0, %s51
      %s69 = sphi 0, %s69
      %s71 = sphi 0, %s69
      %s72 = sphi 0, %s71
      %s86 = sphi 0, %s72
      %s90 = sphi 0, %s90
      %s92 = sphi 0, %s90
      %s93 = sphi 0, %s92
      %s107 = sphi 0, %s93
      %s111 = sphi 0, %s111
      %s113 = sphi 0, %s111
      %s114 = sphi 0, %s113
      %s128 = sphi 0, %s114
      %s132 = sphi 0, %s132
      %s134 = sphi 0, %s132
      %s135 = sphi 0, %s134
      %s149 = sphi 0, %s135
      %s153 = sphi 0, %s153
      %s155 = sphi 0, %s153
      %s156 = sphi 0, %s155
      %s170 = sphi 0, %s156
      %s176 = sphi 0, %s178
      %s179 = sphi 0, %s176
      %s180 = sphi 0, %s179
      %s196 = sphi 0, %s180
    $region4: #{actor_forward_many.1} parent=1 // loop_header_branch
      %17 = sbr.rel (%p15) target = $region8
    $region5: #{actor_forward_many.1} parent=1 // loop_body
      %s19 = ssub.s32 %s14, 1
      %s20 = ssub.s32 %s14, 2
      %s21 = sadd.s32 %s14, 1
      %s22 = ssub.s32 %s14, %s21
      %p23 = scmp.eq.s32.totalorder %s22, 0
      %s25 = sadd.s32 %s24, 1
      %s26 = scalar_select %p23, %s24, %s25
      %p29 = pneg %p23
      %p30 = scmp.eq.s32.totalorder %s14, 1
      %p31 = por %p29, %p30
      %p32 = scmp.ne.s32.totalorder %s24, %s27
      %p33 = scmp.eq.s32.totalorder %s14, 0
      %p34 = por %p32, %p33
      %p35 = scmp.ne.s32.totalorder %s24, %s27
      %p36 = scmp.eq.s32.totalorder %s19, 1
      %p37 = por %p35, %p36
      %p38 = scmp.ne.s32.totalorder %s27, %s28
      %p39 = scmp.eq.s32.totalorder %s19, 0
      %p40 = por %p38, %p39
      %p41 = scmp.ne.s32.totalorder %s27, %s28
      %p42 = scmp.eq.s32.totalorder %s20, 1
      %p43 = por %p41, %p42
      %p45 = scmp.ne.s32.totalorder %s28, %s44
      %p46 = scmp.eq.s32.totalorder %s20, 0
      %p47 = por %p45, %p46
      %s49 = sadd.s32 %s48, 1
      %p52 = scmp.eq.s32.totalorder %s14, 1
      %p53 = scmp.ne.s32.totalorder %s48, %s50
      %p54 = scmp.eq.s32.totalorder %s14, 0
      %p55 = por %p53, %p54
      %p56 = scmp.ne.s32.totalorder %s48, %s50
      %p57 = scmp.eq.s32.totalorder %s19, 1
      %p58 = por %p56, %p57
      %p59 = scmp.ne.s32.totalorder %s50, %s51
      %p60 = scmp.eq.s32.totalorder %s19, 0
      %p61 = por %p59, %p60
      %p62 = scmp.ne.s32.totalorder %s50, %s51
      %p63 = scmp.eq.s32.totalorder %s20, 1
      %p64 = por %p62, %p63
      %p66 = scmp.ne.s32.totalorder %s51, %s65
      %p67 = scmp.eq.s32.totalorder %s20, 0
      %p68 = por %p66, %p67
      %s70 = sadd.s32 %s69, 1
      %p73 = scmp.eq.s32.totalorder %s14, 1
      %p74 = scmp.ne.s32.totalorder %s69, %s71
      %p75 = scmp.eq.s32.totalorder %s14, 0
      %p76 = por %p74, %p75
      %p77 = scmp.ne.s32.totalorder %s69, %s71
      %p78 = scmp.eq.s32.totalorder %s19, 1
      %p79 = por %p77, %p78
      %p80 = scmp.ne.s32.totalorder %s71, %s72
      %p81 = scmp.eq.s32.totalorder %s19, 0
      %p82 = por %p80, %p81
      %p83 = scmp.ne.s32.totalorder %s71, %s72
      %p84 = scmp.eq.s32.totalorder %s20, 1
      %p85 = por %p83, %p84
      %p87 = scmp.ne.s32.totalorder %s72, %s86
      %p88 = scmp.eq.s32.totalorder %s20, 0
      %p89 = por %p87, %p88
      %s91 = sadd.s32 %s90, 1
      %p94 = scmp.eq.s32.totalorder %s14, 1
      %p95 = scmp.ne.s32.totalorder %s90, %s92
      %p96 = scmp.eq.s32.totalorder %s14, 0
      %p97 = por %p95, %p96
      %p98 = scmp.ne.s32.totalorder %s90, %s92
      %p99 = scmp.eq.s32.totalorder %s19, 1
      %p100 = por %p98, %p99
      %p101 = scmp.ne.s32.totalorder %s92, %s93
      %p102 = scmp.eq.s32.totalorder %s19, 0
      %p103 = por %p101, %p102
      %p104 = scmp.ne.s32.totalorder %s92, %s93
      %p105 = scmp.eq.s32.totalorder %s20, 1
      %p106 = por %p104, %p105
      %p108 = scmp.ne.s32.totalorder %s93, %s107
      %p109 = scmp.eq.s32.totalorder %s20, 0
      %p110 = por %p108, %p109
      %s112 = sadd.s32 %s111, 1
      %p115 = scmp.eq.s32.totalorder %s14, 1
      %p116 = scmp.ne.s32.totalorder %s111, %s113
      %p117 = scmp.eq.s32.totalorder %s14, 0
      %p118 = por %p116, %p117
      %p119 = scmp.ne.s32.totalorder %s111, %s113
      %p120 = scmp.eq.s32.totalorder %s19, 1
      %p121 = por %p119, %p120
      %p122 = scmp.ne.s32.totalorder %s113, %s114
      %p123 = scmp.eq.s32.totalorder %s19, 0
      %p124 = por %p122, %p123
      %p125 = scmp.ne.s32.totalorder %s113, %s114
      %p126 = scmp.eq.s32.totalorder %s20, 1
      %p127 = por %p125, %p126
      %p129 = scmp.ne.s32.totalorder %s114, %s128
      %p130 = scmp.eq.s32.totalorder %s20, 0
      %p131 = por %p129, %p130
      %s133 = sadd.s32 %s132, 1
      %p136 = scmp.eq.s32.totalorder %s14, 1
      %p137 = scmp.ne.s32.totalorder %s132, %s134
      %p138 = scmp.eq.s32.totalorder %s14, 0
      %p139 = por %p137, %p138
      %p140 = scmp.ne.s32.totalorder %s132, %s134
      %p141 = scmp.eq.s32.totalorder %s19, 1
      %p142 = por %p140, %p141
      %p143 = scmp.ne.s32.totalorder %s134, %s135
      %p144 = scmp.eq.s32.totalorder %s19, 0
      %p145 = por %p143, %p144
      %p146 = scmp.ne.s32.totalorder %s134, %s135
      %p147 = scmp.eq.s32.totalorder %s20, 1
      %p148 = por %p146, %p147
      %p150 = scmp.ne.s32.totalorder %s135, %s149
      %p151 = scmp.eq.s32.totalorder %s20, 0
      %p152 = por %p150, %p151
      %s154 = sadd.s32 %s153, 1
      %p157 = scmp.eq.s32.totalorder %s14, 1
      %p158 = scmp.ne.s32.totalorder %s153, %s155
      %p159 = scmp.eq.s32.totalorder %s14, 0
      %p160 = por %p158, %p159
      %p161 = scmp.ne.s32.totalorder %s153, %s155
      %p162 = scmp.eq.s32.totalorder %s19, 1
      %p163 = por %p161, %p162
      %p164 = scmp.ne.s32.totalorder %s155, %s156
      %p165 = scmp.eq.s32.totalorder %s19, 0
      %p166 = por %p164, %p165
      %p167 = scmp.ne.s32.totalorder %s155, %s156
      %p168 = scmp.eq.s32.totalorder %s20, 1
      %p169 = por %p167, %p168
      %p171 = scmp.ne.s32.totalorder %s156, %s170
      %p172 = scmp.eq.s32.totalorder %s20, 0
      %p173 = por %p171, %p172
      %s174 = ssub.s32 %s14, %s21
      %p175 = scmp.eq.s32.totalorder %s174, 0
      %s177 = sadd.s32 %s176, 1
      %s178 = scalar_select %p175, %s176, %s177
      %p181 = pneg %p175
      %p182 = scmp.eq.s32.totalorder %s14, 1
      %p183 = por %p181, %p182
      %p184 = scmp.ne.s32.totalorder %s176, %s179
      %p185 = scmp.eq.s32.totalorder %s14, 0
      %p186 = por %p184, %p185
      %p187 = scmp.ne.s32.totalorder %s176, %s179
      %p188 = scmp.eq.s32.totalorder %s19, 1
      %p189 = por %p187, %p188
      %p190 = scmp.ne.s32.totalorder %s179, %s180
      %p191 = scmp.eq.s32.totalorder %s19, 0
      %p192 = por %p190, %p191
      %p193 = scmp.ne.s32.totalorder %s179, %s180
      %p194 = scmp.eq.s32.totalorder %s20, 1
      %p195 = por %p193, %p194
      %p197 = scmp.ne.s32.totalorder %s180, %s196
      %p198 = scmp.eq.s32.totalorder %s20, 0
      %p199 = por %p197, %p198
      %p200 = scmp.le.s32.totalorder 1, %s14
      %p201 = scmp.lt.s32.totalorder %s14, 3
      %p202 = pnand %p200, %p201
      %p203 = pneg %p202
      // Predicated region
      $region9: #{actor_forward_many.1} parent=5 // pred_check
        _
      $region10: #{actor_forward_many.1} parent=5 // pred_check_branch
        %205 = sbr.rel (%p202) target = $region12
      $region11: #{actor_forward_many.1} parent=5 // pred_region
        %s206 = ssub.s32 %s14, 1
        // Predicated region
        $region13: #{actor_forward_many.1} parent=11 // pred_check
          %p207 = pneg %p61
        $region14: #{actor_forward_many.1} parent=11 // pred_check_branch
          %209 = sbr.rel (%p207) target = $region16
        $region15: #{actor_forward_many.1} parent=11 // pred_region
          _
        $region16: #{actor_forward_many.1} parent=11 // pred_fallthru
          _
        // Predicated region
        $region17: #{actor_forward_many.1} parent=11 // pred_check
          %p210 = pneg %p82
        $region18: #{actor_forward_many.1} parent=11 // pred_check_branch
          %212 = sbr.rel (%p210) target = $region20
        $region19: #{actor_forward_many.1} parent=11 // pred_region
          _
        $region20: #{actor_forward_many.1} parent=11 // pred_fallthru
          _
        // Predicated region
        $region21: #{actor_forward_many.1} parent=11 // pred_check
          %p213 = pneg %p103
        $region22: #{actor_forward_many.1} parent=11 // pred_check_branch
          %215 = sbr.rel (%p213) target = $region24
        $region23: #{actor_forward_many.1} parent=11 // pred_region
          %217 = vsyncadd [#allocation3], 0
          %s218 = sshll.u32 %s3, 4
          %s219 = int_to_ptr.hbm [resolvable:$true] %s218
          %s220 = sshll.u32 [#allocation2], 4
          %s221 = int_to_ptr.vmem [resolvable:$true] %s220
          %226 = dma.hbm_to_vmem [thread:$0]  %s219, 12288, %s221, [#allocation3], 192, 192, 12
        $region24: #{actor_forward_many.1} parent=11 // pred_fallthru
          _
        // Predicated region
        $region25: #{actor_forward_many.1} parent=11 // pred_check
          %p227 = pneg %p124
        $region26: #{actor_forward_many.1} parent=11 // pred_check_branch
          %229 = sbr.rel (%p227) target = $region28
        $region27: #{actor_forward_many.1} parent=11 // pred_region
          _
        $region28: #{actor_forward_many.1} parent=11 // pred_fallthru
          _
        // Predicated region
        $region29: #{actor_forward_many.1} parent=11 // pred_check
          %p230 = pneg %p145
        $region30: #{actor_forward_many.1} parent=11 // pred_check_branch
          %232 = sbr.rel (%p230) target = $region32
        $region31: #{actor_forward_many.1} parent=11 // pred_region
          _
        $region32: #{actor_forward_many.1} parent=11 // pred_fallthru
          _
        // Predicated region
        $region33: #{actor_forward_many.1} parent=11 // pred_check
          %p233 = pneg %p166
        $region34: #{actor_forward_many.1} parent=11 // pred_check_branch
          %235 = sbr.rel (%p233) target = $region36
        $region35: #{actor_forward_many.1} parent=11 // pred_region
          _
        $region36: #{actor_forward_many.1} parent=11 // pred_fallthru
          _
      $region12: #{actor_forward_many.1} parent=5 // pred_fallthru
        _
      %p236 = scmp.lt.s32.totalorder %s14, 2
      // Predicated region
      $region37: #{actor_forward_many.1} parent=5 // pred_check
        %p237 = pneg %p236
      $region38: #{actor_forward_many.1} parent=5 // pred_check_branch
        %239 = sbr.rel (%p237) target = $region40
      $region39: #{actor_forward_many.1} parent=5 // pred_region
        // Predicated region
        $region41: #{actor_forward_many.1} parent=39 // pred_check
          %p240 = pneg %p34
        $region42: #{actor_forward_many.1} parent=39 // pred_check_branch
          %242 = sbr.rel (%p240) target = $region44
        $region43: #{actor_forward_many.1} parent=39 // pred_region
          %p243 = scmp.lt.s32.totalorder %s14, 1
          %s244 = scalar_select %p243, %s14, 1
          %s245 = smul.addr %s244, 8
          %s246 = scalar_lea.vmem %s0, %s245
        $region44: #{actor_forward_many.1} parent=39 // pred_fallthru
          _
      $region40: #{actor_forward_many.1} parent=5 // pred_fallthru
        _
      %p247 = scmp.le.s32.totalorder 1, %s14
      %p248 = scmp.lt.s32.totalorder %s14, 3
      %p249 = pnand %p247, %p248
      %p250 = pneg %p249
      // Predicated region
      $region45: #{actor_forward_many.1} parent=5 // pred_check
        _
      $region46: #{actor_forward_many.1} parent=5 // pred_check_branch
        %252 = sbr.rel (%p249) target = $region48
      $region47: #{actor_forward_many.1} parent=5 // pred_region
        %s253 = ssub.s32 %s14, 1
        // Predicated region
        $region49: #{actor_forward_many.1} parent=47 // pred_check
          %p254 = pneg %p103
        $region50: #{actor_forward_many.1} parent=47 // pred_check_branch
          %256 = sbr.rel (%p254) target = $region52
        $region51: #{actor_forward_many.1} parent=47 // pred_region
          %258 = dma.done [#allocation3], 12288
        $region52: #{actor_forward_many.1} parent=47 // pred_fallthru
          _
        %p259 = scmp.lt.s32.totalorder %s19, 1
        %s260 = scalar_select %p259, %s19, 1
        %s261 = smul.addr %s260, 8
        %s262 = scalar_lea.vmem %s0, %s261
        %p263 = pneg %p40
        %p264 = pneg %p37
        %p265 = pneg %p61
        %p266 = pneg %p58
        %p267 = pneg %p82
        %p268 = pneg %p79
        %p269 = pneg %p103
        %p270 = pneg %p100
        %p271 = pneg %p124
        %p272 = pneg %p121
        %p273 = pneg %p145
        %p274 = pneg %p142
        %p275 = pneg %p166
        %p276 = pneg %p163
        %p277 = pneg %p192
        %p278 = pneg %p189
        %p279 = scmp.lt.s32.totalorder %s19, 1
        %s280 = scalar_select %p279, %s19, 1
        %s281 = smul.addr %s280, 8
        %s282 = scalar_lea.vmem %s7, %s281
        %p283 = scmp.lt.s32.totalorder %s19, 1
        %s284 = scalar_select %p283, %s19, 1
        %s285 = smul.addr %s284, 8
        %s286 = scalar_lea.vmem %s0, %s285
        %p287 = scmp.lt.s32.totalorder %s19, 1
        %s288 = scalar_select %p287, %s19, 1
        %s289 = smul.addr %s288, 8
        %s290 = scalar_lea.vmem %s7, %s289
        %v292 = vld [vmem:[%s286] sm:$0xff]
        %vm293 = vcmask 613376
        %v294 = vsel %vm293, %v292, 0.0
        %295 = vadd.xlane.f32.xlu0 %v294
        %v296 = vpop.xlane.xlu0 %295
        %v297 = vmul.f32 %v296, 0.013333334
        %v298 = vsub.f32 %v292, %v297
        %v299 = vmul.f32 %v298, %v298
        %v300 = vsel %vm293, %v299, 0.0
        %301 = vadd.xlane.f32.xlu0 %v300
        %v302 = vpop.xlane.xlu0 %301
        %v303 = vmul.f32 %v302, 0.013513514
        %v304 = vmax.f32 %v303, 1e-12
        %v305 = vrsqrt.pop %v304
        %v306 = vmul.f32 %v305, %v304
        %v307 = vmul.f32 %v306, %v305
        %v308 = vmul.f32 0.5, %v307
        %v309 = vsub.f32 1.5, %v308
        %v310 = vmul.f32 %v305, %v309
        %vm311 = vweird.f32 %v304
        %vm312 = vweird.f32 %v305
        %vm313 = vmor %vm311, %vm312
        %v314 = vsel %vm313, %v305, %v310
        %v315 = vmul.f32 %v298, %v314
        %v316 = vpack.c.bf16 %v315, %v315
        %v317 = vld [vmem:[%s1] sm:$0xff]
        %v318 = vld [vmem:[%s1 + $0x8] sm:$0xff]
        %v319 = vld [vmem:[%s1 + $0x10] sm:$0xff]
        %v320 = vld [vmem:[%s1 + $0x18] sm:$0xff]
        %v321 = vld [vmem:[%s1 + $0x20] sm:$0xff]
        %v322 = vld [vmem:[%s1 + $0x28] sm:$0xff]
        %v323 = vld [vmem:[%s1 + $0x30] sm:$0xff]
        %v324 = vld [vmem:[%s1 + $0x38] sm:$0xff]
        %v325 = vld [vmem:[%s1 + $0x40] sm:$0xff]
        %v326 = vld [vmem:[%s1 + $0x48] sm:$0xff]
        %v327 = vld [vmem:[%s1 + $0x50] sm:$0xff]
        %v328 = vld [vmem:[%s1 + $0x58] sm:$0xff]
        %v329 = vld [vmem:[%s1 + $0x60] sm:$0xff]
        %v330 = vld [vmem:[%s1 + $0x68] sm:$0xff]
        %v331 = vld [vmem:[%s1 + $0x70] sm:$0xff]
        %v332 = vld [vmem:[%s1 + $0x78] sm:$0xff]
        %v333 = vld [vmem:[%s1 + $0x80] sm:$0xff]
        %v334 = vld [vmem:[%s1 + $0x88] sm:$0xff]
        %v335 = vld [vmem:[%s1 + $0x90] sm:$0x33]
        %v336 = vld [vmem:[%s1 + $0x98] sm:$0x33]
        %v337 = vld [vmem:[%s2] sm:$0xf]
        %v339 = vperm.slane %v337, 0
        %v340 = vperm.slane %v337, 1
        %v341 = vperm.slane %v337, 2
        %v342 = vperm.slane %v337, 3
        %v367 = vunpack.c.l.b16 %v317
        %v368 = vunpack.c.h.b16 %v317
        %v369 = vunpack.c.l.b16 %v318
        %v370 = vunpack.c.h.b16 %v318
        %v371 = vunpack.c.l.b16 %v319
        %v372 = vunpack.c.h.b16 %v319
        %v373 = vunpack.c.l.b16 %v320
        %v374 = vunpack.c.h.b16 %v320
        %v375 = vunpack.c.l.b16 %v321
        %v376 = vunpack.c.h.b16 %v321
        %v377 = vunpack.c.l.b16 %v322
        %v378 = vunpack.c.h.b16 %v322
        %v379 = vunpack.c.l.b16 %v323
        %v380 = vunpack.c.h.b16 %v323
        %v381 = vunpack.c.l.b16 %v324
        %v382 = vunpack.c.h.b16 %v324
        %v383 = vunpack.c.l.b16 %v325
        %v384 = vunpack.c.h.b16 %v325
        %v385 = vunpack.c.l.b16 %v326
        %v386 = vunpack.c.h.b16 %v326
        %v387 = vunpack.c.l.b16 %v327
        %v388 = vunpack.c.h.b16 %v327
        %v389 = vunpack.c.l.b16 %v328
        %v390 = vunpack.c.h.b16 %v328
        %v391 = vunpack.c.l.b16 %v329
        %v392 = vunpack.c.h.b16 %v329
        %v393 = vunpack.c.l.b16 %v330
        %v394 = vunpack.c.h.b16 %v330
        %v395 = vunpack.c.l.b16 %v331
        %v396 = vunpack.c.h.b16 %v331
        %v397 = vunpack.c.l.b16 %v332
        %v398 = vunpack.c.h.b16 %v332
        %v399 = vunpack.c.l.b16 %v333
        %v400 = vunpack.c.h.b16 %v333
        %v401 = vunpack.c.l.b16 %v334
        %v402 = vunpack.c.h.b16 %v334
        %v403 = vunpack.c.l.b16 %v335
        %v404 = vunpack.c.h.b16 %v335
        %v405 = vunpack.c.l.b16 %v336
        %v406 = vunpack.c.h.b16 %v336
        %v407 = vpack.c.b16 %v371, %v367
        %v408 = vpack.c.b16 %v372, %v368
        %v409 = vpack.c.b16 %v373, %v369
        %v410 = vpack.c.b16 %v374, %v370
        %v411 = vpack.c.b16 %v379, %v375
        %v412 = vpack.c.b16 %v380, %v376
        %v413 = vpack.c.b16 %v381, %v377
        %v414 = vpack.c.b16 %v382, %v378
        %v415 = vpack.c.b16 %v387, %v383
        %v416 = vpack.c.b16 %v388, %v384
        %v417 = vpack.c.b16 %v389, %v385
        %v418 = vpack.c.b16 %v390, %v386
        %v419 = vpack.c.b16 %v395, %v391
        %v420 = vpack.c.b16 %v396, %v392
        %v421 = vpack.c.b16 %v397, %v393
        %v422 = vpack.c.b16 %v398, %v394
        %v423 = vpack.c.b16 %v403, %v399
        %v424 = vpack.c.b16 %v404, %v400
        %v425 = vpack.c.b16 %v405, %v401
        %v426 = vpack.c.b16 %v406, %v402
        %v444 = vsel %vm293, %v316, 0
        %vm446 = vcmask 1044480
        %vm447 = vcmask 1045504
        %v448 = vsel %vm446, 4294967295, 65535
        %v449 = vsel %vm447, %v448, 0
        %v451 = vand.u32 %v423, %v449
        %v454 = vand.u32 %v424, %v449
        %v457 = vand.u32 %v425, %v449
        %v460 = vand.u32 %v426, %v449
        %462 = vmatpush.bf16.msra.mxu0 0
        %463 = vmatpush.bf16.msra.mxu0 0
        %464 = vmatpush.bf16.msra.mxu0 0
        %465 = vmatpush.bf16.msra.mxu0 %v451
        %466 = vmatpush.bf16.msra.mxu0 %v419
        %467 = vmatpush.bf16.msra.mxu0 %v415
        %468 = vmatpush.bf16.msra.mxu0 %v411
        %469 = vmatpush.bf16.msra.mxu0 %v407
        %470 = vmatmul.bf16.gmra.mxu0 %v444
        %v471 = vpop.f32.mrf.mxu0
        %v472 = vadd.f32 %v339, %v471
        %v473 = vpop.f32.mrf.mxu0
        %474 = vdwg.mxu0
        %475 = vmatpush.bf16.msra.mxu0 0
        %476 = vmatpush.bf16.msra.mxu0 0
        %477 = vmatpush.bf16.msra.mxu0 0
        %478 = vmatpush.bf16.msra.mxu0 %v454
        %479 = vmatpush.bf16.msra.mxu0 %v420
        %480 = vmatpush.bf16.msra.mxu0 %v416
        %481 = vmatpush.bf16.msra.mxu0 %v412
        %482 = vmatpush.bf16.msra.mxu0 %v408
        %483 = vmatmul.bf16.gmra.mxu0 %v444
        %v484 = vpop.f32.mrf.mxu0
        %v485 = vadd.f32 %v340, %v484
        %v486 = vpop.f32.mrf.mxu0
        %487 = vdwg.mxu0
        %488 = vmatpush.bf16.msra.mxu0 0
        %489 = vmatpush.bf16.msra.mxu0 0
        %490 = vmatpush.bf16.msra.mxu0 0
        %491 = vmatpush.bf16.msra.mxu0 %v457
        %492 = vmatpush.bf16.msra.mxu0 %v421
        %493 = vmatpush.bf16.msra.mxu0 %v417
        %494 = vmatpush.bf16.msra.mxu0 %v413
        %495 = vmatpush.bf16.msra.mxu0 %v409
        %496 = vmatmul.bf16.gmra.mxu0 %v444
        %v497 = vpop.f32.mrf.mxu0
        %v498 = vadd.f32 %v341, %v497
        %v499 = vpop.f32.mrf.mxu0
        %500 = vdwg.mxu0
        %501 = vmatpush.bf16.msra.mxu0 0
        %502 = vmatpush.bf16.msra.mxu0 0
        %503 = vmatpush.bf16.msra.mxu0 0
        %504 = vmatpush.bf16.msra.mxu0 %v460
        %505 = vmatpush.bf16.msra.mxu0 %v422
        %506 = vmatpush.bf16.msra.mxu0 %v418
        %507 = vmatpush.bf16.msra.mxu0 %v414
        %508 = vmatpush.bf16.msra.mxu0 %v410
        %509 = vmatmul.bf16.gmra.mxu0 %v444
        %v510 = vpop.f32.mrf.mxu0
        %v511 = vadd.f32 %v342, %v510
        %v512 = vpop.f32.mrf.mxu0
        %513 = vdwg.mxu0
        %v514 = vmax.f32 %v472, 0.0
        %v515 = vmax.f32 %v485, 0.0
        %v516 = vmax.f32 %v498, 0.0
        %v517 = vmax.f32 %v511, 0.0
        %v518 = vpack.c.bf16 %v514, %v514
        %v519 = vpack.c.bf16 %v515, %v515
        %v520 = vpack.c.bf16 %v516, %v516
        %v521 = vpack.c.bf16 %v517, %v517
        %v522 = vld [vmem:[#allocation2] sm:$0xff]
        %v523 = vld [vmem:[#allocation2 + $0x8] sm:$0xf]
        %v524 = vld [vmem:[#allocation2 + $0xc] sm:$0xff]
        %v525 = vld [vmem:[#allocation2 + $0x14] sm:$0xf]
        %v526 = vld [vmem:[#allocation2 + $0x18] sm:$0xff]
        %v527 = vld [vmem:[#allocation2 + $0x20] sm:$0xf]
        %v528 = vld [vmem:[#allocation2 + $0x24] sm:$0xff]
        %v529 = vld [vmem:[#allocation2 + $0x2c] sm:$0xf]
        %v530 = vld [vmem:[#allocation2 + $0x30] sm:$0xff]
        %v531 = vld [vmem:[#allocation2 + $0x38] sm:$0xf]
        %v532 = vld [vmem:[#allocation2 + $0x3c] sm:$0xff]
        %v533 = vld [vmem:[#allocation2 + $0x44] sm:$0xf]
        %v534 = vld [vmem:[#allocation2 + $0x48] sm:$0xff]
        %v535 = vld [vmem:[#allocation2 + $0x50] sm:$0xf]
        %v536 = vld [vmem:[#allocation2 + $0x54] sm:$0xff]
        %v537 = vld [vmem:[#allocation2 + $0x5c] sm:$0xf]
        %v538 = vld [vmem:[#allocation2 + $0x60] sm:$0xff]
        %v539 = vld [vmem:[#allocation2 + $0x68] sm:$0xf]
        %v540 = vld [vmem:[#allocation2 + $0x6c] sm:$0xff]
        %v541 = vld [vmem:[#allocation2 + $0x74] sm:$0xf]
        %v542 = vld [vmem:[#allocation2 + $0x78] sm:$0xff]
        %v543 = vld [vmem:[#allocation2 + $0x80] sm:$0xf]
        %v544 = vld [vmem:[#allocation2 + $0x84] sm:$0xff]
        %v545 = vld [vmem:[#allocation2 + $0x8c] sm:$0xf]
        %v546 = vld [vmem:[#allocation2 + $0x90] sm:$0xff]
        %v547 = vld [vmem:[#allocation2 + $0x98] sm:$0xf]
        %v548 = vld [vmem:[#allocation2 + $0x9c] sm:$0xff]
        %v549 = vld [vmem:[#allocation2 + $0xa4] sm:$0xf]
        %v550 = vld [vmem:[#allocation2 + $0xa8] sm:$0xff]
        %v551 = vld [vmem:[#allocation2 + $0xb0] sm:$0xf]
        %v552 = vld [vmem:[#allocation2 + $0xb4] sm:$0xff]
        %v553 = vld [vmem:[#allocation2 + $0xbc] sm:$0xf]
        %v554 = vld [vmem:[#allocation2 + $0xc0] sm:$0xff]
        %v555 = vld [vmem:[#allocation2 + $0xc8] sm:$0xf]
        %v556 = vld [vmem:[#allocation2 + $0xcc] sm:$0xff]
        %v557 = vld [vmem:[#allocation2 + $0xd4] sm:$0xf]
        %v558 = vld [vmem:[#allocation2 + $0xd8] sm:$0xff]
        %v559 = vld [vmem:[#allocation2 + $0xe0] sm:$0xf]
        %v560 = vld [vmem:[#allocation2 + $0xe4] sm:$0xff]
        %v561 = vld [vmem:[#allocation2 + $0xec] sm:$0xf]
        %v562 = vld [vmem:[#allocation2 + $0xf0] sm:$0xff]
        %v563 = vld [vmem:[#allocation2 + $0xf8] sm:$0xf]
        %v564 = vld [vmem:[#allocation2 + $0xfc] sm:$0xff]
        %v565 = vld [vmem:[#allocation2 + $0x104] sm:$0xf]
        %v566 = vld [vmem:[#allocation2 + $0x108] sm:$0xff]
        %v567 = vld [vmem:[#allocation2 + $0x110] sm:$0xf]
        %v568 = vld [vmem:[#allocation2 + $0x114] sm:$0xff]
        %v569 = vld [vmem:[#allocation2 + $0x11c] sm:$0xf]
        %v570 = vld [vmem:[#allocation2 + $0x120] sm:$0xff]
        %v571 = vld [vmem:[#allocation2 + $0x128] sm:$0xf]
        %v572 = vld [vmem:[#allocation2 + $0x12c] sm:$0xff]
        %v573 = vld [vmem:[#allocation2 + $0x134] sm:$0xf]
        %v574 = vld [vmem:[#allocation2 + $0x138] sm:$0xff]
        %v575 = vld [vmem:[#allocation2 + $0x140] sm:$0xf]
        %v576 = vld [vmem:[#allocation2 + $0x144] sm:$0xff]
        %v577 = vld [vmem:[#allocation2 + $0x14c] sm:$0xf]
        %v578 = vld [vmem:[#allocation2 + $0x150] sm:$0xff]
        %v579 = vld [vmem:[#allocation2 + $0x158] sm:$0xf]
        %v580 = vld [vmem:[#allocation2 + $0x15c] sm:$0xff]
        %v581 = vld [vmem:[#allocation2 + $0x164] sm:$0xf]
        %v582 = vld [vmem:[#allocation2 + $0x168] sm:$0xff]
        %v583 = vld [vmem:[#allocation2 + $0x170] sm:$0xf]
        %v584 = vld [vmem:[#allocation2 + $0x174] sm:$0xff]
        %v585 = vld [vmem:[#allocation2 + $0x17c] sm:$0xf]
        %v586 = vld [vmem:[#allocation2 + $0x180] sm:$0xff]
        %v587 = vld [vmem:[#allocation2 + $0x188] sm:$0xf]
        %v588 = vld [vmem:[#allocation2 + $0x18c] sm:$0xff]
        %v589 = vld [vmem:[#allocation2 + $0x194] sm:$0xf]
        %v590 = vld [vmem:[#allocation2 + $0x198] sm:$0xff]
        %v591 = vld [vmem:[#allocation2 + $0x1a0] sm:$0xf]
        %v592 = vld [vmem:[#allocation2 + $0x1a4] sm:$0xff]
        %v593 = vld [vmem:[#allocation2 + $0x1ac] sm:$0xf]
        %v594 = vld [vmem:[#allocation2 + $0x1b0] sm:$0xff]
        %v595 = vld [vmem:[#allocation2 + $0x1b8] sm:$0xf]
        %v596 = vld [vmem:[#allocation2 + $0x1bc] sm:$0xff]
        %v597 = vld [vmem:[#allocation2 + $0x1c4] sm:$0xf]
        %v598 = vld [vmem:[#allocation2 + $0x1c8] sm:$0xff]
        %v599 = vld [vmem:[#allocation2 + $0x1d0] sm:$0xf]
        %v600 = vld [vmem:[#allocation2 + $0x1d4] sm:$0xff]
        %v601 = vld [vmem:[#allocation2 + $0x1dc] sm:$0xf]
        %v602 = vld [vmem:[#allocation2 + $0x1e0] sm:$0xff]
        %v603 = vld [vmem:[#allocation2 + $0x1e8] sm:$0xf]
        %v604 = vld [vmem:[#allocation2 + $0x1ec] sm:$0xff]
        %v605 = vld [vmem:[#allocation2 + $0x1f4] sm:$0xf]
        %v606 = vld [vmem:[#allocation2 + $0x1f8] sm:$0xff]
        %v607 = vld [vmem:[#allocation2 + $0x200] sm:$0xf]
        %v608 = vld [vmem:[#allocation2 + $0x204] sm:$0xff]
        %v609 = vld [vmem:[#allocation2 + $0x20c] sm:$0xf]
        %v610 = vld [vmem:[#allocation2 + $0x210] sm:$0xff]
        %v611 = vld [vmem:[#allocation2 + $0x218] sm:$0xf]
        %v612 = vld [vmem:[#allocation2 + $0x21c] sm:$0xff]
        %v613 = vld [vmem:[#allocation2 + $0x224] sm:$0xf]
        %v614 = vld [vmem:[#allocation2 + $0x228] sm:$0xff]
        %v615 = vld [vmem:[#allocation2 + $0x230] sm:$0xf]
        %v616 = vld [vmem:[#allocation2 + $0x234] sm:$0xff]
        %v617 = vld [vmem:[#allocation2 + $0x23c] sm:$0xf]
        %v618 = vld [vmem:[#allocation2 + $0x240] sm:$0xff]
        %v619 = vld [vmem:[#allocation2 + $0x248] sm:$0xf]
        %v620 = vld [vmem:[#allocation2 + $0x24c] sm:$0xff]
        %v621 = vld [vmem:[#allocation2 + $0x254] sm:$0xf]
        %v622 = vld [vmem:[#allocation2 + $0x258] sm:$0xff]
        %v623 = vld [vmem:[#allocation2 + $0x260] sm:$0xf]
        %v624 = vld [vmem:[#allocation2 + $0x264] sm:$0xff]
        %v625 = vld [vmem:[#allocation2 + $0x26c] sm:$0xf]
        %v626 = vld [vmem:[#allocation2 + $0x270] sm:$0xff]
        %v627 = vld [vmem:[#allocation2 + $0x278] sm:$0xf]
        %v628 = vld [vmem:[#allocation2 + $0x27c] sm:$0xff]
        %v629 = vld [vmem:[#allocation2 + $0x284] sm:$0xf]
        %v630 = vld [vmem:[#allocation2 + $0x288] sm:$0xff]
        %v631 = vld [vmem:[#allocation2 + $0x290] sm:$0xf]
        %v632 = vld [vmem:[#allocation2 + $0x294] sm:$0xff]
        %v633 = vld [vmem:[#allocation2 + $0x29c] sm:$0xf]
        %v634 = vld [vmem:[#allocation2 + $0x2a0] sm:$0xff]
        %v635 = vld [vmem:[#allocation2 + $0x2a8] sm:$0xf]
        %v636 = vld [vmem:[#allocation2 + $0x2ac] sm:$0xff]
        %v637 = vld [vmem:[#allocation2 + $0x2b4] sm:$0xf]
        %v638 = vld [vmem:[#allocation2 + $0x2b8] sm:$0xff]
        %v639 = vld [vmem:[#allocation2 + $0x2c0] sm:$0xf]
        %v640 = vld [vmem:[#allocation2 + $0x2c4] sm:$0xff]
        %v641 = vld [vmem:[#allocation2 + $0x2cc] sm:$0xf]
        %v642 = vld [vmem:[#allocation2 + $0x2d0] sm:$0xff]
        %v643 = vld [vmem:[#allocation2 + $0x2d8] sm:$0xf]
        %v644 = vld [vmem:[#allocation2 + $0x2dc] sm:$0xff]
        %v645 = vld [vmem:[#allocation2 + $0x2e4] sm:$0xf]
        %v646 = vld [vmem:[#allocation2 + $0x2e8] sm:$0xff]
        %v647 = vld [vmem:[#allocation2 + $0x2f0] sm:$0xf]
        %v648 = vld [vmem:[#allocation2 + $0x2f4] sm:$0xff]
        %v649 = vld [vmem:[#allocation2 + $0x2fc] sm:$0xf]
        %v650 = vld [vmem:[%s4] sm:$0x7]
        %v652 = vperm.slane %v650, 0
        %v653 = vperm.slane %v650, 1
        %v654 = vperm.slane %v650, 2
        %v786 = vunpack.c.l.b16 %v522
        %v787 = vunpack.c.h.b16 %v522
        %v788 = vunpack.c.l.b16 %v523
        %v789 = vunpack.c.l.b16 %v524
        %v790 = vunpack.c.h.b16 %v524
        %v791 = vunpack.c.l.b16 %v525
        %v792 = vunpack.c.l.b16 %v526
        %v793 = vunpack.c.h.b16 %v526
        %v794 = vunpack.c.l.b16 %v527
        %v795 = vunpack.c.l.b16 %v528
        %v796 = vunpack.c.h.b16 %v528
        %v797 = vunpack.c.l.b16 %v529
        %v798 = vunpack.c.l.b16 %v530
        %v799 = vunpack.c.h.b16 %v530
        %v800 = vunpack.c.l.b16 %v531
        %v801 = vunpack.c.l.b16 %v532
        %v802 = vunpack.c.h.b16 %v532
        %v803 = vunpack.c.l.b16 %v533
        %v804 = vunpack.c.l.b16 %v534
        %v805 = vunpack.c.h.b16 %v534
        %v806 = vunpack.c.l.b16 %v535
        %v807 = vunpack.c.l.b16 %v536
        %v808 = vunpack.c.h.b16 %v536
        %v809 = vunpack.c.l.b16 %v537
        %v810 = vunpack.c.l.b16 %v538
        %v811 = vunpack.c.h.b16 %v538
        %v812 = vunpack.c.l.b16 %v539
        %v813 = vunpack.c.l.b16 %v540
        %v814 = vunpack.c.h.b16 %v540
        %v815 = vunpack.c.l.b16 %v541
        %v816 = vunpack.c.l.b16 %v542
        %v817 = vunpack.c.h.b16 %v542
        %v818 = vunpack.c.l.b16 %v543
        %v819 = vunpack.c.l.b16 %v544
        %v820 = vunpack.c.h.b16 %v544
        %v821 = vunpack.c.l.b16 %v545
        %v822 = vunpack.c.l.b16 %v546
        %v823 = vunpack.c.h.b16 %v546
        %v824 = vunpack.c.l.b16 %v547
        %v825 = vunpack.c.l.b16 %v548
        %v826 = vunpack.c.h.b16 %v548
        %v827 = vunpack.c.l.b16 %v549
        %v828 = vunpack.c.l.b16 %v550
        %v829 = vunpack.c.h.b16 %v550
        %v830 = vunpack.c.l.b16 %v551
        %v831 = vunpack.c.l.b16 %v552
        %v832 = vunpack.c.h.b16 %v552
        %v833 = vunpack.c.l.b16 %v553
        %v834 = vunpack.c.l.b16 %v554
        %v835 = vunpack.c.h.b16 %v554
        %v836 = vunpack.c.l.b16 %v555
        %v837 = vunpack.c.l.b16 %v556
        %v838 = vunpack.c.h.b16 %v556
        %v839 = vunpack.c.l.b16 %v557
        %v840 = vunpack.c.l.b16 %v558
        %v841 = vunpack.c.h.b16 %v558
        %v842 = vunpack.c.l.b16 %v559
        %v843 = vunpack.c.l.b16 %v560
        %v844 = vunpack.c.h.b16 %v560
        %v845 = vunpack.c.l.b16 %v561
        %v846 = vunpack.c.l.b16 %v562
        %v847 = vunpack.c.h.b16 %v562
        %v848 = vunpack.c.l.b16 %v563
        %v849 = vunpack.c.l.b16 %v564
        %v850 = vunpack.c.h.b16 %v564
        %v851 = vunpack.c.l.b16 %v565
        %v852 = vunpack.c.l.b16 %v566
        %v853 = vunpack.c.h.b16 %v566
        %v854 = vunpack.c.l.b16 %v567
        %v855 = vunpack.c.l.b16 %v568
        %v856 = vunpack.c.h.b16 %v568
        %v857 = vunpack.c.l.b16 %v569
        %v858 = vunpack.c.l.b16 %v570
        %v859 = vunpack.c.h.b16 %v570
        %v860 = vunpack.c.l.b16 %v571
        %v861 = vunpack.c.l.b16 %v572
        %v862 = vunpack.c.h.b16 %v572
        %v863 = vunpack.c.l.b16 %v573
        %v864 = vunpack.c.l.b16 %v574
        %v865 = vunpack.c.h.b16 %v574
        %v866 = vunpack.c.l.b16 %v575
        %v867 = vunpack.c.l.b16 %v576
        %v868 = vunpack.c.h.b16 %v576
        %v869 = vunpack.c.l.b16 %v577
        %v870 = vunpack.c.l.b16 %v578
        %v871 = vunpack.c.h.b16 %v578
        %v872 = vunpack.c.l.b16 %v579
        %v873 = vunpack.c.l.b16 %v580
        %v874 = vunpack.c.h.b16 %v580
        %v875 = vunpack.c.l.b16 %v581
        %v876 = vunpack.c.l.b16 %v582
        %v877 = vunpack.c.h.b16 %v582
        %v878 = vunpack.c.l.b16 %v583
        %v879 = vunpack.c.l.b16 %v584
        %v880 = vunpack.c.h.b16 %v584
        %v881 = vunpack.c.l.b16 %v585
        %v882 = vunpack.c.l.b16 %v586
        %v883 = vunpack.c.h.b16 %v586
        %v884 = vunpack.c.l.b16 %v587
        %v885 = vunpack.c.l.b16 %v588
        %v886 = vunpack.c.h.b16 %v588
        %v887 = vunpack.c.l.b16 %v589
        %v888 = vunpack.c.l.b16 %v590
        %v889 = vunpack.c.h.b16 %v590
        %v890 = vunpack.c.l.b16 %v591
        %v891 = vunpack.c.l.b16 %v592
        %v892 = vunpack.c.h.b16 %v592
        %v893 = vunpack.c.l.b16 %v593
        %v894 = vunpack.c.l.b16 %v594
        %v895 = vunpack.c.h.b16 %v594
        %v896 = vunpack.c.l.b16 %v595
        %v897 = vunpack.c.l.b16 %v596
        %v898 = vunpack.c.h.b16 %v596
        %v899 = vunpack.c.l.b16 %v597
        %v900 = vunpack.c.l.b16 %v598
        %v901 = vunpack.c.h.b16 %v598
        %v902 = vunpack.c.l.b16 %v599
        %v903 = vunpack.c.l.b16 %v600
        %v904 = vunpack.c.h.b16 %v600
        %v905 = vunpack.c.l.b16 %v601
        %v906 = vunpack.c.l.b16 %v602
        %v907 = vunpack.c.h.b16 %v602
        %v908 = vunpack.c.l.b16 %v603
        %v909 = vunpack.c.l.b16 %v604
        %v910 = vunpack.c.h.b16 %v604
        %v911 = vunpack.c.l.b16 %v605
        %v912 = vunpack.c.l.b16 %v606
        %v913 = vunpack.c.h.b16 %v606
        %v914 = vunpack.c.l.b16 %v607
        %v915 = vunpack.c.l.b16 %v608
        %v916 = vunpack.c.h.b16 %v608
        %v917 = vunpack.c.l.b16 %v609
        %v918 = vunpack.c.l.b16 %v610
        %v919 = vunpack.c.h.b16 %v610
        %v920 = vunpack.c.l.b16 %v611
        %v921 = vunpack.c.l.b16 %v612
        %v922 = vunpack.c.h.b16 %v612
        %v923 = vunpack.c.l.b16 %v613
        %v924 = vunpack.c.l.b16 %v614
        %v925 = vunpack.c.h.b16 %v614
        %v926 = vunpack.c.l.b16 %v615
        %v927 = vunpack.c.l.b16 %v616
        %v928 = vunpack.c.h.b16 %v616
        %v929 = vunpack.c.l.b16 %v617
        %v930 = vunpack.c.l.b16 %v618
        %v931 = vunpack.c.h.b16 %v618
        %v932 = vunpack.c.l.b16 %v619
        %v933 = vunpack.c.l.b16 %v620
        %v934 = vunpack.c.h.b16 %v620
        %v935 = vunpack.c.l.b16 %v621
        %v936 = vunpack.c.l.b16 %v622
        %v937 = vunpack.c.h.b16 %v622
        %v938 = vunpack.c.l.b16 %v623
        %v939 = vunpack.c.l.b16 %v624
        %v940 = vunpack.c.h.b16 %v624
        %v941 = vunpack.c.l.b16 %v625
        %v942 = vunpack.c.l.b16 %v626
        %v943 = vunpack.c.h.b16 %v626
        %v944 = vunpack.c.l.b16 %v627
        %v945 = vunpack.c.l.b16 %v628
        %v946 = vunpack.c.h.b16 %v628
        %v947 = vunpack.c.l.b16 %v629
        %v948 = vunpack.c.l.b16 %v630
        %v949 = vunpack.c.h.b16 %v630
        %v950 = vunpack.c.l.b16 %v631
        %v951 = vunpack.c.l.b16 %v632
        %v952 = vunpack.c.h.b16 %v632
        %v953 = vunpack.c.l.b16 %v633
        %v954 = vunpack.c.l.b16 %v634
        %v955 = vunpack.c.h.b16 %v634
        %v956 = vunpack.c.l.b16 %v635
        %v957 = vunpack.c.l.b16 %v636
        %v958 = vunpack.c.h.b16 %v636
        %v959 = vunpack.c.l.b16 %v637
        %v960 = vunpack.c.l.b16 %v638
        %v961 = vunpack.c.h.b16 %v638
        %v962 = vunpack.c.l.b16 %v639
        %v963 = vunpack.c.l.b16 %v640
        %v964 = vunpack.c.h.b16 %v640
        %v965 = vunpack.c.l.b16 %v641
        %v966 = vunpack.c.l.b16 %v642
        %v967 = vunpack.c.h.b16 %v642
        %v968 = vunpack.c.l.b16 %v643
        %v969 = vunpack.c.l.b16 %v644
        %v970 = vunpack.c.h.b16 %v644
        %v971 = vunpack.c.l.b16 %v645
        %v972 = vunpack.c.l.b16 %v646
        %v973 = vunpack.c.h.b16 %v646
        %v974 = vunpack.c.l.b16 %v647
        %v975 = vunpack.c.l.b16 %v648
        %v976 = vunpack.c.h.b16 %v648
        %v977 = vunpack.c.l.b16 %v649
        %v978 = vpack.c.b16 %v789, %v786
        %v979 = vpack.c.b16 %v790, %v787
        %v980 = vpack.c.b16 %v791, %v788
        %v981 = vpack.c.b16 %v795, %v792
        %v982 = vpack.c.b16 %v796, %v793
        %v983 = vpack.c.b16 %v797, %v794
        %v984 = vpack.c.b16 %v801, %v798
        %v985 = vpack.c.b16 %v802, %v799
        %v986 = vpack.c.b16 %v803, %v800
        %v987 = vpack.c.b16 %v807, %v804
        %v988 = vpack.c.b16 %v808, %v805
        %v989 = vpack.c.b16 %v809, %v806
        %v990 = vpack.c.b16 %v813, %v810
        %v991 = vpack.c.b16 %v814, %v811
        %v992 = vpack.c.b16 %v815, %v812
        %v993 = vpack.c.b16 %v819, %v816
        %v994 = vpack.c.b16 %v820, %v817
        %v995 = vpack.c.b16 %v821, %v818
        %v996 = vpack.c.b16 %v825, %v822
        %v997 = vpack.c.b16 %v826, %v823
        %v998 = vpack.c.b16 %v827, %v824
        %v999 = vpack.c.b16 %v831, %v828
        %v1000 = vpack.c.b16 %v832, %v829
        %v1001 = vpack.c.b16 %v833, %v830
        %v1002 = vpack.c.b16 %v837, %v834
        %v1003 = vpack.c.b16 %v838, %v835
        %v1004 = vpack.c.b16 %v839, %v836
        %v1005 = vpack.c.b16 %v843, %v840
        %v1006 = vpack.c.b16 %v844, %v841
        %v1007 = vpack.c.b16 %v845, %v842
        %v1008 = vpack.c.b16 %v849, %v846
        %v1009 = vpack.c.b16 %v850, %v847
        %v1010 = vpack.c.b16 %v851, %v848
        %v1011 = vpack.c.b16 %v855, %v852
        %v1012 = vpack.c.b16 %v856, %v853
        %v1013 = vpack.c.b16 %v857, %v854
        %v1014 = vpack.c.b16 %v861, %v858
        %v1015 = vpack.c.b16 %v862, %v859
        %v1016 = vpack.c.b16 %v863, %v860
        %v1017 = vpack.c.b16 %v867, %v864
        %v1018 = vpack.c.b16 %v868, %v865
        %v1019 = vpack.c.b16 %v869, %v866
        %v1020 = vpack.c.b16 %v873, %v870
        %v1021 = vpack.c.b16 %v874, %v871
        %v1022 = vpack.c.b16 %v875, %v872
        %v1023 = vpack.c.b16 %v879, %v876
        %v1024 = vpack.c.b16 %v880, %v877
        %v1025 = vpack.c.b16 %v881, %v878
        %v1026 = vpack.c.b16 %v885, %v882
        %v1027 = vpack.c.b16 %v886, %v883
        %v1028 = vpack.c.b16 %v887, %v884
        %v1029 = vpack.c.b16 %v891, %v888
        %v1030 = vpack.c.b16 %v892, %v889
        %v1031 = vpack.c.b16 %v893, %v890
        %v1032 = vpack.c.b16 %v897, %v894
        %v1033 = vpack.c.b16 %v898, %v895
        %v1034 = vpack.c.b16 %v899, %v896
        %v1035 = vpack.c.b16 %v903, %v900
        %v1036 = vpack.c.b16 %v904, %v901
        %v1037 = vpack.c.b16 %v905, %v902
        %v1038 = vpack.c.b16 %v909, %v906
        %v1039 = vpack.c.b16 %v910, %v907
        %v1040 = vpack.c.b16 %v911, %v908
        %v1041 = vpack.c.b16 %v915, %v912
        %v1042 = vpack.c.b16 %v916, %v913
        %v1043 = vpack.c.b16 %v917, %v914
        %v1044 = vpack.c.b16 %v921, %v918
        %v1045 = vpack.c.b16 %v922, %v919
        %v1046 = vpack.c.b16 %v923, %v920
        %v1047 = vpack.c.b16 %v927, %v924
        %v1048 = vpack.c.b16 %v928, %v925
        %v1049 = vpack.c.b16 %v929, %v926
        %v1050 = vpack.c.b16 %v933, %v930
        %v1051 = vpack.c.b16 %v934, %v931
        %v1052 = vpack.c.b16 %v935, %v932
        %v1053 = vpack.c.b16 %v939, %v936
        %v1054 = vpack.c.b16 %v940, %v937
        %v1055 = vpack.c.b16 %v941, %v938
        %v1056 = vpack.c.b16 %v945, %v942
        %v1057 = vpack.c.b16 %v946, %v943
        %v1058 = vpack.c.b16 %v947, %v944
        %v1059 = vpack.c.b16 %v951, %v948
        %v1060 = vpack.c.b16 %v952, %v949
        %v1061 = vpack.c.b16 %v953, %v950
        %v1062 = vpack.c.b16 %v957, %v954
        %v1063 = vpack.c.b16 %v958, %v955
        %v1064 = vpack.c.b16 %v959, %v956
        %v1065 = vpack.c.b16 %v963, %v960
        %v1066 = vpack.c.b16 %v964, %v961
        %v1067 = vpack.c.b16 %v965, %v962
        %v1068 = vpack.c.b16 %v969, %v966
        %v1069 = vpack.c.b16 %v970, %v967
        %v1070 = vpack.c.b16 %v971, %v968
        %v1071 = vpack.c.b16 %v975, %v972
        %v1072 = vpack.c.b16 %v976, %v973
        %v1073 = vpack.c.b16 %v977, %v974
        %1170 = vmatpush.bf16.msra.mxu0 %v999
        %1171 = vmatpush.bf16.msra.mxu0 %v996
        %1172 = vmatpush.bf16.msra.mxu0 %v993
        %1173 = vmatpush.bf16.msra.mxu0 %v990
        %1174 = vmatpush.bf16.msra.mxu0 %v987
        %1175 = vmatpush.bf16.msra.mxu0 %v984
        %1176 = vmatpush.bf16.msra.mxu0 %v981
        %1177 = vmatpush.bf16.msra.mxu0 %v978
        %1178 = vmatmul.bf16.gmra.mxu0 %v518
        %v1179 = vpop.f32.mrf.mxu0
        %v1180 = vadd.f32 %v652, %v1179
        %v1181 = vpop.f32.mrf.mxu0
        %1182 = vdwg.mxu0
        %1183 = vmatpush.bf16.msra.mxu0 %v1023
        %1184 = vmatpush.bf16.msra.mxu0 %v1020
        %1185 = vmatpush.bf16.msra.mxu0 %v1017
        %1186 = vmatpush.bf16.msra.mxu0 %v1014
        %1187 = vmatpush.bf16.msra.mxu0 %v1011
        %1188 = vmatpush.bf16.msra.mxu0 %v1008
        %1189 = vmatpush.bf16.msra.mxu0 %v1005
        %1190 = vmatpush.bf16.msra.mxu0 %v1002
        %1191 = vmatmul.bf16.gmra.mxu0 %v519
        %v1192 = vpop.f32.mrf.mxu0
        %v1193 = vadd.f32 %v1180, %v1192
        %v1194 = vpop.f32.mrf.mxu0
        %1195 = vdwg.mxu0
        %1196 = vmatpush.bf16.msra.mxu0 %v1047
        %1197 = vmatpush.bf16.msra.mxu0 %v1044
        %1198 = vmatpush.bf16.msra.mxu0 %v1041
        %1199 = vmatpush.bf16.msra.mxu0 %v1038
        %1200 = vmatpush.bf16.msra.mxu0 %v1035
        %1201 = vmatpush.bf16.msra.mxu0 %v1032
        %1202 = vmatpush.bf16.msra.mxu0 %v1029
        %1203 = vmatpush.bf16.msra.mxu0 %v1026
        %1204 = vmatmul.bf16.gmra.mxu0 %v520
        %v1205 = vpop.f32.mrf.mxu0
        %v1206 = vadd.f32 %v1193, %v1205
        %v1207 = vpop.f32.mrf.mxu0
        %1208 = vdwg.mxu0
        %1209 = vmatpush.bf16.msra.mxu0 %v1071
        %1210 = vmatpush.bf16.msra.mxu0 %v1068
        %1211 = vmatpush.bf16.msra.mxu0 %v1065
        %1212 = vmatpush.bf16.msra.mxu0 %v1062
        %1213 = vmatpush.bf16.msra.mxu0 %v1059
        %1214 = vmatpush.bf16.msra.mxu0 %v1056
        %1215 = vmatpush.bf16.msra.mxu0 %v1053
        %1216 = vmatpush.bf16.msra.mxu0 %v1050
        %1217 = vmatmul.bf16.gmra.mxu0 %v521
        %v1218 = vpop.f32.mrf.mxu0
        %v1219 = vadd.f32 %v1206, %v1218
        %v1220 = vpop.f32.mrf.mxu0
        %1221 = vdwg.mxu0
        %1222 = vmatpush.bf16.msra.mxu0 %v1000
        %1223 = vmatpush.bf16.msra.mxu0 %v997
        %1224 = vmatpush.bf16.msra.mxu0 %v994
        %1225 = vmatpush.bf16.msra.mxu0 %v991
        %1226 = vmatpush.bf16.msra.mxu0 %v988
        %1227 = vmatpush.bf16.msra.mxu0 %v985
        %1228 = vmatpush.bf16.msra.mxu0 %v982
        %1229 = vmatpush.bf16.msra.mxu0 %v979
        %1230 = vmatmul.bf16.gmra.mxu0 %v518
        %v1231 = vpop.f32.mrf.mxu0
        %v1232 = vadd.f32 %v653, %v1231
        %v1233 = vpop.f32.mrf.mxu0
        %1234 = vdwg.mxu0
        %1235 = vmatpush.bf16.msra.mxu0 %v1024
        %1236 = vmatpush.bf16.msra.mxu0 %v1021
        %1237 = vmatpush.bf16.msra.mxu0 %v1018
        %1238 = vmatpush.bf16.msra.mxu0 %v1015
        %1239 = vmatpush.bf16.msra.mxu0 %v1012
        %1240 = vmatpush.bf16.msra.mxu0 %v1009
        %1241 = vmatpush.bf16.msra.mxu0 %v1006
        %1242 = vmatpush.bf16.msra.mxu0 %v1003
        %1243 = vmatmul.bf16.gmra.mxu0 %v519
        %v1244 = vpop.f32.mrf.mxu0
        %v1245 = vadd.f32 %v1232, %v1244
        %v1246 = vpop.f32.mrf.mxu0
        %1247 = vdwg.mxu0
        %1248 = vmatpush.bf16.msra.mxu0 %v1048
        %1249 = vmatpush.bf16.msra.mxu0 %v1045
        %1250 = vmatpush.bf16.msra.mxu0 %v1042
        %1251 = vmatpush.bf16.msra.mxu0 %v1039
        %1252 = vmatpush.bf16.msra.mxu0 %v1036
        %1253 = vmatpush.bf16.msra.mxu0 %v1033
        %1254 = vmatpush.bf16.msra.mxu0 %v1030
        %1255 = vmatpush.bf16.msra.mxu0 %v1027
        %1256 = vmatmul.bf16.gmra.mxu0 %v520
        %v1257 = vpop.f32.mrf.mxu0
        %v1258 = vadd.f32 %v1245, %v1257
        %v1259 = vpop.f32.mrf.mxu0
        %1260 = vdwg.mxu0
        %1261 = vmatpush.bf16.msra.mxu0 %v1072
        %1262 = vmatpush.bf16.msra.mxu0 %v1069
        %1263 = vmatpush.bf16.msra.mxu0 %v1066
        %1264 = vmatpush.bf16.msra.mxu0 %v1063
        %1265 = vmatpush.bf16.msra.mxu0 %v1060
        %1266 = vmatpush.bf16.msra.mxu0 %v1057
        %1267 = vmatpush.bf16.msra.mxu0 %v1054
        %1268 = vmatpush.bf16.msra.mxu0 %v1051
        %1269 = vmatmul.bf16.gmra.mxu0 %v521
        %v1270 = vpop.f32.mrf.mxu0
        %v1271 = vadd.f32 %v1258, %v1270
        %v1272 = vpop.f32.mrf.mxu0
        %1273 = vdwg.mxu0
        %1274 = vmatpush.bf16.msra.mxu0 %v1001
        %1275 = vmatpush.bf16.msra.mxu0 %v998
        %1276 = vmatpush.bf16.msra.mxu0 %v995
        %1277 = vmatpush.bf16.msra.mxu0 %v992
        %1278 = vmatpush.bf16.msra.mxu0 %v989
        %1279 = vmatpush.bf16.msra.mxu0 %v986
        %1280 = vmatpush.bf16.msra.mxu0 %v983
        %1281 = vmatpush.bf16.msra.mxu0 %v980
        %1282 = vmatmul.bf16.gmra.mxu0 %v518
        %v1283 = vpop.f32.mrf.mxu0
        %v1284 = vadd.f32 %v654, %v1283
        %v1285 = vpop.f32.mrf.mxu0
        %1286 = vdwg.mxu0
        %1287 = vmatpush.bf16.msra.mxu0 %v1025
        %1288 = vmatpush.bf16.msra.mxu0 %v1022
        %1289 = vmatpush.bf16.msra.mxu0 %v1019
        %1290 = vmatpush.bf16.msra.mxu0 %v1016
        %1291 = vmatpush.bf16.msra.mxu0 %v1013
        %1292 = vmatpush.bf16.msra.mxu0 %v1010
        %1293 = vmatpush.bf16.msra.mxu0 %v1007
        %1294 = vmatpush.bf16.msra.mxu0 %v1004
        %1295 = vmatmul.bf16.gmra.mxu0 %v519
        %v1296 = vpop.f32.mrf.mxu0
        %v1297 = vadd.f32 %v1284, %v1296
        %v1298 = vpop.f32.mrf.mxu0
        %1299 = vdwg.mxu0
        %1300 = vmatpush.bf16.msra.mxu0 %v1049
        %1301 = vmatpush.bf16.msra.mxu0 %v1046
        %1302 = vmatpush.bf16.msra.mxu0 %v1043
        %1303 = vmatpush.bf16.msra.mxu0 %v1040
        %1304 = vmatpush.bf16.msra.mxu0 %v1037
        %1305 = vmatpush.bf16.msra.mxu0 %v1034
        %1306 = vmatpush.bf16.msra.mxu0 %v1031
        %1307 = vmatpush.bf16.msra.mxu0 %v1028
        %1308 = vmatmul.bf16.gmra.mxu0 %v520
        %v1309 = vpop.f32.mrf.mxu0
        %v1310 = vadd.f32 %v1297, %v1309
        %v1311 = vpop.f32.mrf.mxu0
        %1312 = vdwg.mxu0
        %1313 = vmatpush.bf16.msra.mxu0 %v1073
        %1314 = vmatpush.bf16.msra.mxu0 %v1070
        %1315 = vmatpush.bf16.msra.mxu0 %v1067
        %1316 = vmatpush.bf16.msra.mxu0 %v1064
        %1317 = vmatpush.bf16.msra.mxu0 %v1061
        %1318 = vmatpush.bf16.msra.mxu0 %v1058
        %1319 = vmatpush.bf16.msra.mxu0 %v1055
        %1320 = vmatpush.bf16.msra.mxu0 %v1052
        %1321 = vmatmul.bf16.gmra.mxu0 %v521
        %v1322 = vpop.f32.mrf.mxu0
        %v1323 = vadd.f32 %v1310, %v1322
        %v1324 = vpop.f32.mrf.mxu0
        %1325 = vdwg.mxu0
        %v1326 = vmax.f32 %v1219, 0.0
        %v1327 = vmax.f32 %v1271, 0.0
        %v1328 = vmax.f32 %v1323, 0.0
        %v1329 = vpack.c.bf16 %v1326, %v1326
        %v1330 = vpack.c.bf16 %v1327, %v1327
        %v1331 = vpack.c.bf16 %v1328, %v1328
        %v1332 = vld [vmem:[%s5] sm:$0xf]
        %v1333 = vld [vmem:[%s5 + $0x4] sm:$0xf]
        %v1334 = vld [vmem:[%s5 + $0x8] sm:$0xf]
        %v1335 = vld [vmem:[%s5 + $0xc] sm:$0xf]
        %v1336 = vld [vmem:[%s5 + $0x10] sm:$0xf]
        %v1337 = vld [vmem:[%s5 + $0x14] sm:$0xf]
        %v1338 = vld [vmem:[%s5 + $0x18] sm:$0xf]
        %v1339 = vld [vmem:[%s5 + $0x1c] sm:$0xf]
        %v1340 = vld [vmem:[%s5 + $0x20] sm:$0xf]
        %v1341 = vld [vmem:[%s5 + $0x24] sm:$0xf]
        %v1342 = vld [vmem:[%s5 + $0x28] sm:$0xf]
        %v1343 = vld [vmem:[%s5 + $0x2c] sm:$0xf]
        %v1344 = vld [vmem:[%s5 + $0x30] sm:$0xf]
        %v1345 = vld [vmem:[%s5 + $0x34] sm:$0xf]
        %v1346 = vld [vmem:[%s5 + $0x38] sm:$0xf]
        %v1347 = vld [vmem:[%s5 + $0x3c] sm:$0xf]
        %v1348 = vld [vmem:[%s5 + $0x40] sm:$0xf]
        %v1349 = vld [vmem:[%s5 + $0x44] sm:$0xf]
        %v1350 = vld [vmem:[%s5 + $0x48] sm:$0xf]
        %v1351 = vld [vmem:[%s5 + $0x4c] sm:$0xf]
        %v1352 = vld [vmem:[%s5 + $0x50] sm:$0xf]
        %v1353 = vld [vmem:[%s5 + $0x54] sm:$0xf]
        %v1354 = vld [vmem:[%s5 + $0x58] sm:$0xf]
        %v1355 = vld [vmem:[%s5 + $0x5c] sm:$0xf]
        %v1356 = vld [vmem:[%s5 + $0x60] sm:$0xf]
        %v1357 = vld [vmem:[%s5 + $0x64] sm:$0xf]
        %v1358 = vld [vmem:[%s5 + $0x68] sm:$0xf]
        %v1359 = vld [vmem:[%s5 + $0x6c] sm:$0xf]
        %v1360 = vld [vmem:[%s5 + $0x70] sm:$0xf]
        %v1361 = vld [vmem:[%s5 + $0x74] sm:$0xf]
        %v1362 = vld [vmem:[%s5 + $0x78] sm:$0xf]
        %v1363 = vld [vmem:[%s5 + $0x7c] sm:$0xf]
        %v1364 = vld [vmem:[%s5 + $0x80] sm:$0xf]
        %v1365 = vld [vmem:[%s5 + $0x84] sm:$0xf]
        %v1366 = vld [vmem:[%s5 + $0x88] sm:$0xf]
        %v1367 = vld [vmem:[%s5 + $0x8c] sm:$0xf]
        %v1368 = vld [vmem:[%s5 + $0x90] sm:$0xf]
        %v1369 = vld [vmem:[%s5 + $0x94] sm:$0xf]
        %v1370 = vld [vmem:[%s5 + $0x98] sm:$0xf]
        %v1371 = vld [vmem:[%s5 + $0x9c] sm:$0xf]
        %v1372 = vld [vmem:[%s5 + $0xa0] sm:$0xf]
        %v1373 = vld [vmem:[%s5 + $0xa4] sm:$0xf]
        %v1374 = vld [vmem:[%s5 + $0xa8] sm:$0xf]
        %v1375 = vld [vmem:[%s5 + $0xac] sm:$0xf]
        %v1376 = vld [vmem:[%s5 + $0xb0] sm:$0xf]
        %v1377 = vld [vmem:[%s5 + $0xb4] sm:$0xf]
        %v1378 = vld [vmem:[%s5 + $0xb8] sm:$0xf]
        %v1379 = vld [vmem:[%s5 + $0xbc] sm:$0xf]
        %v1380 = vld [vmem:[%s6] sm:$0x1]
        %v1382 = vperm.slane %v1380, 0
        %v1432 = vunpack.c.l.b16 %v1332
        %v1433 = vunpack.c.l.b16 %v1333
        %v1434 = vunpack.c.l.b16 %v1334
        %v1435 = vunpack.c.l.b16 %v1335
        %v1436 = vunpack.c.l.b16 %v1336
        %v1437 = vunpack.c.l.b16 %v1337
        %v1438 = vunpack.c.l.b16 %v1338
        %v1439 = vunpack.c.l.b16 %v1339
        %v1440 = vunpack.c.l.b16 %v1340
        %v1441 = vunpack.c.l.b16 %v1341
        %v1442 = vunpack.c.l.b16 %v1342
        %v1443 = vunpack.c.l.b16 %v1343
        %v1444 = vunpack.c.l.b16 %v1344
        %v1445 = vunpack.c.l.b16 %v1345
        %v1446 = vunpack.c.l.b16 %v1346
        %v1447 = vunpack.c.l.b16 %v1347
        %v1448 = vunpack.c.l.b16 %v1348
        %v1449 = vunpack.c.l.b16 %v1349
        %v1450 = vunpack.c.l.b16 %v1350
        %v1451 = vunpack.c.l.b16 %v1351
        %v1452 = vunpack.c.l.b16 %v1352
        %v1453 = vunpack.c.l.b16 %v1353
        %v1454 = vunpack.c.l.b16 %v1354
        %v1455 = vunpack.c.l.b16 %v1355
        %v1456 = vunpack.c.l.b16 %v1356
        %v1457 = vunpack.c.l.b16 %v1357
        %v1458 = vunpack.c.l.b16 %v1358
        %v1459 = vunpack.c.l.b16 %v1359
        %v1460 = vunpack.c.l.b16 %v1360
        %v1461 = vunpack.c.l.b16 %v1361
        %v1462 = vunpack.c.l.b16 %v1362
        %v1463 = vunpack.c.l.b16 %v1363
        %v1464 = vunpack.c.l.b16 %v1364
        %v1465 = vunpack.c.l.b16 %v1365
        %v1466 = vunpack.c.l.b16 %v1366
        %v1467 = vunpack.c.l.b16 %v1367
        %v1468 = vunpack.c.l.b16 %v1368
        %v1469 = vunpack.c.l.b16 %v1369
        %v1470 = vunpack.c.l.b16 %v1370
        %v1471 = vunpack.c.l.b16 %v1371
        %v1472 = vunpack.c.l.b16 %v1372
        %v1473 = vunpack.c.l.b16 %v1373
        %v1474 = vunpack.c.l.b16 %v1374
        %v1475 = vunpack.c.l.b16 %v1375
        %v1476 = vunpack.c.l.b16 %v1376
        %v1477 = vunpack.c.l.b16 %v1377
        %v1478 = vunpack.c.l.b16 %v1378
        %v1479 = vunpack.c.l.b16 %v1379
        %v1480 = vpack.c.b16 %v1433, %v1432
        %v1481 = vpack.c.b16 %v1435, %v1434
        %v1482 = vpack.c.b16 %v1437, %v1436
        %v1483 = vpack.c.b16 %v1439, %v1438
        %v1484 = vpack.c.b16 %v1441, %v1440
        %v1485 = vpack.c.b16 %v1443, %v1442
        %v1486 = vpack.c.b16 %v1445, %v1444
        %v1487 = vpack.c.b16 %v1447, %v1446
        %v1488 = vpack.c.b16 %v1449, %v1448
        %v1489 = vpack.c.b16 %v1451, %v1450
        %v1490 = vpack.c.b16 %v1453, %v1452
        %v1491 = vpack.c.b16 %v1455, %v1454
        %v1492 = vpack.c.b16 %v1457, %v1456
        %v1493 = vpack.c.b16 %v1459, %v1458
        %v1494 = vpack.c.b16 %v1461, %v1460
        %v1495 = vpack.c.b16 %v1463, %v1462
        %v1496 = vpack.c.b16 %v1465, %v1464
        %v1497 = vpack.c.b16 %v1467, %v1466
        %v1498 = vpack.c.b16 %v1469, %v1468
        %v1499 = vpack.c.b16 %v1471, %v1470
        %v1500 = vpack.c.b16 %v1473, %v1472
        %v1501 = vpack.c.b16 %v1475, %v1474
        %v1502 = vpack.c.b16 %v1477, %v1476
        %v1503 = vpack.c.b16 %v1479, %v1478
        %1528 = vmatpush.bf16.msra.mxu0 %v1487
        %1529 = vmatpush.bf16.msra.mxu0 %v1486
        %1530 = vmatpush.bf16.msra.mxu0 %v1485
        %1531 = vmatpush.bf16.msra.mxu0 %v1484
        %1532 = vmatpush.bf16.msra.mxu0 %v1483
        %1533 = vmatpush.bf16.msra.mxu0 %v1482
        %1534 = vmatpush.bf16.msra.mxu0 %v1481
        %1535 = vmatpush.bf16.msra.mxu0 %v1480
        %1536 = vmatmul.bf16.gmra.mxu0 %v1329
        %v1537 = vpop.f32.mrf.mxu0
        %v1538 = vadd.f32 %v1382, %v1537
        %v1539 = vpop.f32.mrf.mxu0
        %1540 = vdwg.mxu0
        %1541 = vmatpush.bf16.msra.mxu0 %v1495
        %1542 = vmatpush.bf16.msra.mxu0 %v1494
        %1543 = vmatpush.bf16.msra.mxu0 %v1493
        %1544 = vmatpush.bf16.msra.mxu0 %v1492
        %1545 = vmatpush.bf16.msra.mxu0 %v1491
        %1546 = vmatpush.bf16.msra.mxu0 %v1490
        %1547 = vmatpush.bf16.msra.mxu0 %v1489
        %1548 = vmatpush.bf16.msra.mxu0 %v1488
        %1549 = vmatmul.bf16.gmra.mxu0 %v1330
        %v1550 = vpop.f32.mrf.mxu0
        %v1551 = vadd.f32 %v1538, %v1550
        %v1552 = vpop.f32.mrf.mxu0
        %1553 = vdwg.mxu0
        %1554 = vmatpush.bf16.msra.mxu0 %v1503
        %1555 = vmatpush.bf16.msra.mxu0 %v1502
        %1556 = vmatpush.bf16.msra.mxu0 %v1501
        %1557 = vmatpush.bf16.msra.mxu0 %v1500
        %1558 = vmatpush.bf16.msra.mxu0 %v1499
        %1559 = vmatpush.bf16.msra.mxu0 %v1498
        %1560 = vmatpush.bf16.msra.mxu0 %v1497
        %1561 = vmatpush.bf16.msra.mxu0 %v1496
        %1562 = vmatmul.bf16.gmra.mxu0 %v1331
        %v1563 = vpop.f32.mrf.mxu0
        %v1564 = vadd.f32 %v1551, %v1563
        %v1565 = vpop.f32.mrf.mxu0
        %1566 = vdwg.mxu0
        %v1567 = vand.u32 2147483647, %v1564
        %v1568 = vsub.f32 0.0, %v1567
        %v1569 = vmul.f32 %v1568, 1.442695
        %v1570 = vpow.pop %v1569
        %v1571 = vadd.f32 %v1570, 1.0
        %v1572 = vrcp.pop %v1571
        %vm1573 = vcmp.ge.f32.partialorder %v1564, 0.0
        %v1574 = vmul.f32 %v1570, %v1572
        %v1575 = vsel %vm1573, %v1572, %v1574
        %vm1576 = vcmask 31744
        %1577 = vst.msk [vmem:[%s290] sm:$0xff] %vm1576, %v1575
        %p1578 = scmp.lt.s32.totalorder %s19, 1
        %s1579 = scalar_select %p1578, %s19, 1
        %s1580 = smul.addr %s1579, 8
        %s1581 = scalar_lea.vmem %s7, %s1580
        // Predicated region
        $region53: #{actor_forward_many.1} parent=47 // pred_check
          %p1582 = pneg %p189
        $region54: #{actor_forward_many.1} parent=47 // pred_check_branch
          %1584 = sbr.rel (%p1582) target = $region56
        $region55: #{actor_forward_many.1} parent=47 // pred_region
          _
        $region56: #{actor_forward_many.1} parent=47 // pred_fallthru
          _
      $region48: #{actor_forward_many.1} parent=5 // pred_fallthru
        _
      %p1585 = scmp.le.s32.totalorder 2, %s14
      // Predicated region
      $region57: #{actor_forward_many.1} parent=5 // pred_check
        %p1586 = pneg %p1585
      $region58: #{actor_forward_many.1} parent=5 // pred_check_branch
        %1588 = sbr.rel (%p1586) target = $region60
      $region59: #{actor_forward_many.1} parent=5 // pred_region
        %s1589 = ssub.s32 %s14, 2
        // Predicated region
        $region61: #{actor_forward_many.1} parent=59 // pred_check
          %p1590 = pneg %p195
        $region62: #{actor_forward_many.1} parent=59 // pred_check_branch
          %1592 = sbr.rel (%p1590) target = $region64
        $region63: #{actor_forward_many.1} parent=59 // pred_region
          %p1593 = scmp.lt.s32.totalorder %s20, 1
          %s1594 = scalar_select %p1593, %s20, 1
          %s1595 = smul.addr %s1594, 8
          %s1596 = scalar_lea.vmem %s7, %s1595
        $region64: #{actor_forward_many.1} parent=59 // pred_fallthru
          _
      $region60: #{actor_forward_many.1} parent=5 // pred_fallthru
        _
    $region6: #{actor_forward_many.1} parent=1 // loop_footer
      %s18 = sadd.s32 1, %s14
    $region7: #{actor_forward_many.1} parent=1 // loop_footer_branch
      %13 = sbr.rel target = $region3
    $region8: #{actor_forward_many.1} parent=1 // loop_exit
      _
    %1597 = vsyncpa [#allocation3], 1
    %s1598 = scalar_lea.sflag [#allocation3], 1
    %1599 = vsyncpa %s1598, 1

</llo_original>
